<compile_context>
chip_gen: v5e
topology: v5e:2x2
jax: 0.10.0
libtpu: 0.0.40
codegen_flags: <defaults>
</compile_context>

<pallas_src>
import functools
import math
import numpy as np
import jax
import jax.numpy as jnp
from jax.experimental import pallas as pl
from jax.experimental.pallas import tpu as pltpu


# ----------------------------- synthetic hparams -----------------------------
class hp:
    channels = 32          # embed dim (divisible by num_heads)
    num_heads = 4


# ------------------------------- Pallas kernel -------------------------------
def _interpolate_kernel(x_ref, wqkv_ref, bqkv_ref, wo_ref, bo_ref,
                        wc_ref, bc_ref, g_ref, be_ref, o_ref,
                        *, B, T, C, H, eps):
    """Fused MultiheadAttention -> Conv1d(k=1) -> FreqNorm -> +residual.

    x_ref: (B, T, C)      wqkv_ref: (C, 3C)   bqkv_ref: (1, 3C)
    wo_ref/wc_ref: (C, C) bo_ref/bc_ref/g_ref/be_ref: (1, C)
    o_ref: (B, T, C)
    """
    Dh = C // H
    scale = 1.0 / math.sqrt(Dh)          # PyTorch MHA scales q by 1/sqrt(head_dim)

    wqkv = wqkv_ref[...]                 # x @ wqkv == x @ in_proj_weight.T
    bqkv = bqkv_ref[...]
    wo = wo_ref[...]                     # out_proj.weight.T
    bo = bo_ref[...]
    wc = wc_ref[...]                     # conv.weight[:, :, 0].T  (1x1 conv == linear)
    bc = bc_ref[...]

    xs, ys = [], []
    for b in range(B):                   # static unroll (single TensorCore anyway)
        xb = x_ref[b]                                                # (T, C)
        xs.append(xb)

        # ---- multi-head self-attention for batch element b ----
        qkv = jnp.dot(xb, wqkv, preferred_element_type=jnp.float32) + bqkv  # (T, 3C)
        q = qkv[:, 0:C] * scale
        k = qkv[:, C:2 * C]
        v = qkv[:, 2 * C:3 * C]
        heads = []
        for h in range(H):               # static unroll over heads
            qh = q[:, h * Dh:(h + 1) * Dh]                           # (T, Dh)
            kh = k[:, h * Dh:(h + 1) * Dh]
            vh = v[:, h * Dh:(h + 1) * Dh]
            # q @ k^T via trans_b dot_general (no explicit transpose needed)
            s = jax.lax.dot_general(qh, kh, (((1,), (1,)), ((), ())),
                                    preferred_element_type=jnp.float32)  # (T, T)
            m = jnp.max(s, axis=-1, keepdims=True)
            p = jnp.exp(s - m)
            p = p / jnp.sum(p, axis=-1, keepdims=True)
            heads.append(jnp.dot(p, vh, preferred_element_type=jnp.float32))
        att = jnp.concatenate(heads, axis=1)                         # (T, C)
        att = jnp.dot(att, wo, preferred_element_type=jnp.float32) + bo

        # ---- pointwise Conv1d (kernel_size = 1) ----
        ys.append(jnp.dot(att, wc, preferred_element_type=jnp.float32) + bc)

    y = jnp.concatenate(ys, axis=0)                                  # (B*T, C)
    x2 = jnp.concatenate(xs, axis=0)                                 # (B*T, C)

    # ---- FreqNorm: training-mode BatchNorm1d, per-channel stats over (B, T) ----
    mean = jnp.mean(y, axis=0, keepdims=True)                        # (1, C) single pass
    d = y - mean
    var = jnp.mean(d * d, axis=0, keepdims=True)                     # biased variance
    out = d * jax.lax.rsqrt(var + eps) * g_ref[...] + be_ref[...] + x2

    for b in range(B):
        o_ref[b] = out[b * T:(b + 1) * T, :]


# --------------------------------- wrapper ------------------------------------
def interpolate_forward(params, x, *, num_heads=hp.num_heads, eps=1e-5):
    B, T, C = x.shape
    wqkv = params["in_proj_weight"].T.astype(jnp.float32)            # (C, 3C)
    bqkv = params["in_proj_bias"].reshape(1, 3 * C).astype(jnp.float32)
    wo = params["out_proj_weight"].T.astype(jnp.float32)             # (C, C)
    bo = params["out_proj_bias"].reshape(1, C).astype(jnp.float32)
    wc = params["conv_weight"][:, :, 0].T.astype(jnp.float32)        # (C, C)
    bc = params["conv_bias"].reshape(1, C).astype(jnp.float32)
    g = params["norm_gamma"].reshape(1, C).astype(jnp.float32)
    be = params["norm_beta"].reshape(1, C).astype(jnp.float32)

    kern = functools.partial(_interpolate_kernel, B=B, T=T, C=C, H=num_heads,
                             eps=eps)

    def full(*shape):
        return pl.BlockSpec(shape, lambda i: (0,) * len(shape))

    return pl.pallas_call(
        kern,
        out_shape=jax.ShapeDtypeStruct((B, T, C), jnp.float32),
        grid=(1,),                       # one step: whole problem lives in VMEM
        in_specs=[
            full(B, T, C),
            full(C, 3 * C), full(1, 3 * C),
            full(C, C), full(1, C),
            full(C, C), full(1, C),
            full(1, C), full(1, C),
        ],
        out_specs=full(B, T, C),
        compiler_params=pltpu.CompilerParams(
            dimension_semantics=("arbitrary",)),
    )(x.astype(jnp.float32), wqkv, bqkv, wo, bo, wc, bc, g, be)


# --------------------------- pure-JAX reference --------------------------------
def interpolate_reference(params, x, *, num_heads=hp.num_heads, eps=1e-5):
    B, T, C = x.shape
    Dh = C // num_heads
    qkv = jnp.einsum("btc,dc->btd", x, params["in_proj_weight"]) + params["in_proj_bias"]
    q, k, v = jnp.split(qkv, 3, axis=-1)

    def split_heads(a):
        return a.reshape(B, T, num_heads, Dh).transpose(0, 2, 1, 3)   # (B,H,T,Dh)

    q, k, v = map(split_heads, (q, k, v))
    s = jnp.einsum("bhtd,bhsd->bhts", q, k) / math.sqrt(Dh)
    p = jax.nn.softmax(s, axis=-1)
    att = jnp.einsum("bhts,bhsd->bhtd", p, v).transpose(0, 2, 1, 3).reshape(B, T, C)
    att = jnp.einsum("btc,dc->btd", att, params["out_proj_weight"]) + params["out_proj_bias"]
    y = jnp.einsum("btc,dc->btd", att, params["conv_weight"][:, :, 0]) + params["conv_bias"]
    mean = jnp.mean(y, axis=(0, 1), keepdims=True)
    var = jnp.mean((y - mean) ** 2, axis=(0, 1), keepdims=True)       # biased (training)
    yn = (y - mean) / jnp.sqrt(var + eps) * params["norm_gamma"] + params["norm_beta"]
    return yn + x


# ------------------------------- param init ------------------------------------
def init_params(key, C=hp.channels):
    ks = jax.random.split(key, 8)

    def u(k, shape, bound):
        return jax.random.uniform(k, shape, jnp.float32, -bound, bound)

    bound = 1.0 / math.sqrt(C)
    return {
        "in_proj_weight": u(ks[0], (3 * C, C), bound),
        "in_proj_bias": u(ks[1], (3 * C,), bound),
        "out_proj_weight": u(ks[2], (C, C), bound),
        "out_proj_bias": u(ks[3], (C,), bound),
        "conv_weight": u(ks[4], (C, C, 1), bound),                   # nn.Conv1d(C, C, 1)
        "conv_bias": u(ks[5], (C,), bound),
        "norm_gamma": 1.0 + 0.1 * jax.random.normal(ks[6], (C,), jnp.float32),
        "norm_beta": 0.1 * jax.random.normal(ks[7], (C,), jnp.float32),
    }


# ---------------------------------- main ----------------------------------------
if __name__ == "__main__":
    key = jax.random.PRNGKey(0)
    pkey, xkey = jax.random.split(key)
    params = init_params(pkey)

    B, T, C = 2, 16, hp.channels
    x = jax.random.normal(xkey, (B, T, C), jnp.float32)

    fwd = jax.jit(interpolate_forward)
    out = fwd(params, x)
    jax.block_until_ready(out)

    assert out.shape == (B, T, C), out.shape
    assert bool(jnp.all(jnp.isfinite(out)))

    ref = interpolate_reference(params, x)
    np.testing.assert_allclose(np.asarray(out), np.asarray(ref),
                               atol=2e-3, rtol=2e-3)
    print("KERNEL_OK")
</pallas_src>

<mosaic_0001>
module attributes {stable_mosaic.version = 11 : i64} {
  func.func @_interpolate_kernel(%arg0: i32, %arg1: memref<2x16x32xf32, #tpu.memory_space<vmem>>, %arg2: memref<32x96xf32, #tpu.memory_space<vmem>>, %arg3: memref<1x96xf32, #tpu.memory_space<vmem>>, %arg4: memref<32x32xf32, #tpu.memory_space<vmem>>, %arg5: memref<1x32xf32, #tpu.memory_space<vmem>>, %arg6: memref<32x32xf32, #tpu.memory_space<vmem>>, %arg7: memref<1x32xf32, #tpu.memory_space<vmem>>, %arg8: memref<1x32xf32, #tpu.memory_space<vmem>>, %arg9: memref<1x32xf32, #tpu.memory_space<vmem>>, %arg10: memref<2x16x32xf32, #tpu.memory_space<vmem>>) attributes {dimension_semantics = [#tpu.dimension_semantics<arbitrary>], iteration_bounds = array<i64: 1>, scalar_prefetch = 0 : i64, scratch_operands = 0 : i64, tpu.core_type = #tpu.core_type<tc>, window_params = [{pipeline_mode = #tpu.pipeline_mode<synchronous>, transform_indices = @transform_0, window_bounds = array<i64: 2, 16, 32>}, {pipeline_mode = #tpu.pipeline_mode<synchronous>, transform_indices = @transform_1, window_bounds = array<i64: 32, 96>}, {pipeline_mode = #tpu.pipeline_mode<synchronous>, transform_indices = @transform_2, window_bounds = array<i64: 1, 96>}, {pipeline_mode = #tpu.pipeline_mode<synchronous>, transform_indices = @transform_3, window_bounds = array<i64: 32, 32>}, {pipeline_mode = #tpu.pipeline_mode<synchronous>, transform_indices = @transform_4, window_bounds = array<i64: 1, 32>}, {pipeline_mode = #tpu.pipeline_mode<synchronous>, transform_indices = @transform_5, window_bounds = array<i64: 32, 32>}, {pipeline_mode = #tpu.pipeline_mode<synchronous>, transform_indices = @transform_6, window_bounds = array<i64: 1, 32>}, {pipeline_mode = #tpu.pipeline_mode<synchronous>, transform_indices = @transform_7, window_bounds = array<i64: 1, 32>}, {pipeline_mode = #tpu.pipeline_mode<synchronous>, transform_indices = @transform_8, window_bounds = array<i64: 1, 32>}, {pipeline_mode = #tpu.pipeline_mode<synchronous>, transform_indices = @transform_9, window_bounds = array<i64: 2, 16, 32>}]} {
    %c0 = arith.constant 0 : index
    %c0_0 = arith.constant 0 : index
    %0 = vector.load %arg2[%c0, %c0_0] : memref<32x96xf32, #tpu.memory_space<vmem>>, vector<32x96xf32>
    %c0_1 = arith.constant 0 : index
    %c0_2 = arith.constant 0 : index
    %1 = vector.load %arg3[%c0_1, %c0_2] : memref<1x96xf32, #tpu.memory_space<vmem>>, vector<1x96xf32>
    %c0_3 = arith.constant 0 : index
    %c0_4 = arith.constant 0 : index
    %2 = vector.load %arg4[%c0_3, %c0_4] : memref<32x32xf32, #tpu.memory_space<vmem>>, vector<32x32xf32>
    %c0_5 = arith.constant 0 : index
    %c0_6 = arith.constant 0 : index
    %3 = vector.load %arg5[%c0_5, %c0_6] : memref<1x32xf32, #tpu.memory_space<vmem>>, vector<1x32xf32>
    %c0_7 = arith.constant 0 : index
    %c0_8 = arith.constant 0 : index
    %4 = vector.load %arg6[%c0_7, %c0_8] : memref<32x32xf32, #tpu.memory_space<vmem>>, vector<32x32xf32>
    %c0_9 = arith.constant 0 : index
    %c0_10 = arith.constant 0 : index
    %5 = vector.load %arg7[%c0_9, %c0_10] : memref<1x32xf32, #tpu.memory_space<vmem>>, vector<1x32xf32>
    %c0_11 = arith.constant 0 : index
    %c0_12 = arith.constant 0 : index
    %c0_13 = arith.constant 0 : index
    %6 = vector.load %arg1[%c0_11, %c0_12, %c0_13] : memref<2x16x32xf32, #tpu.memory_space<vmem>>, vector<1x16x32xf32>
    %7 = vector.shape_cast %6 : vector<1x16x32xf32> to vector<16x32xf32>
    %cst = arith.constant dense<0.000000e+00> : vector<16x96xf32>
    %8 = tpu.matmul %7, %0, %cst {dimension_numbers = #tpu.dot_dimension_numbers<[1], [0], [0], [1], [0, 0, 1, 1], [], []>} : vector<16x32xf32>, vector<32x96xf32>, vector<16x96xf32> -> vector<16x96xf32>
    %9 = vector.broadcast %1 : vector<1x96xf32> to vector<16x96xf32>
    %10 = arith.addf %8, %9 : vector<16x96xf32>
    %11 = vector.extract_strided_slice %10 {offsets = [0, 0], sizes = [16, 32], strides = [1, 1]} : vector<16x96xf32> to vector<16x32xf32>
    %cst_14 = arith.constant 0.353553385 : f32
    %12 = vector.broadcast %cst_14 : f32 to vector<16x32xf32>
    %13 = arith.mulf %11, %12 : vector<16x32xf32>
    %14 = vector.extract_strided_slice %10 {offsets = [0, 32], sizes = [16, 32], strides = [1, 1]} : vector<16x96xf32> to vector<16x32xf32>
    %15 = vector.extract_strided_slice %10 {offsets = [0, 64], sizes = [16, 32], strides = [1, 1]} : vector<16x96xf32> to vector<16x32xf32>
    %16 = vector.extract_strided_slice %13 {offsets = [0, 0], sizes = [16, 8], strides = [1, 1]} : vector<16x32xf32> to vector<16x8xf32>
    %17 = vector.extract_strided_slice %14 {offsets = [0, 0], sizes = [16, 8], strides = [1, 1]} : vector<16x32xf32> to vector<16x8xf32>
    %18 = vector.extract_strided_slice %15 {offsets = [0, 0], sizes = [16, 8], strides = [1, 1]} : vector<16x32xf32> to vector<16x8xf32>
    %cst_15 = arith.constant dense<0.000000e+00> : vector<16x16xf32>
    %19 = tpu.matmul %16, %17, %cst_15 {dimension_numbers = #tpu.dot_dimension_numbers<[1], [1], [0], [0], [0, 0, 1, 0], [], []>} : vector<16x8xf32>, vector<16x8xf32>, vector<16x16xf32> -> vector<16x16xf32>
    %cst_16 = arith.constant dense<0xFF800000> : vector<16xf32>
    %20 = vector.multi_reduction <maximumf>, %19, %cst_16 [1] : vector<16x16xf32> to vector<16xf32>
    %21 = vector.shape_cast %20 : vector<16xf32> to vector<16x1xf32>
    %22 = vector.broadcast %21 : vector<16x1xf32> to vector<16x16xf32>
    %23 = arith.subf %19, %22 : vector<16x16xf32>
    %24 = math.exp %23 : vector<16x16xf32>
    %cst_17 = arith.constant dense<0.000000e+00> : vector<16xf32>
    %25 = vector.multi_reduction <add>, %24, %cst_17 [1] : vector<16x16xf32> to vector<16xf32>
    %26 = vector.shape_cast %25 : vector<16xf32> to vector<16x1xf32>
    %27 = vector.broadcast %26 : vector<16x1xf32> to vector<16x16xf32>
    %28 = arith.divf %24, %27 : vector<16x16xf32>
    %cst_18 = arith.constant dense<0.000000e+00> : vector<16x8xf32>
    %29 = tpu.matmul %28, %18, %cst_18 {dimension_numbers = #tpu.dot_dimension_numbers<[1], [0], [0], [1], [0, 0, 1, 1], [], []>} : vector<16x16xf32>, vector<16x8xf32>, vector<16x8xf32> -> vector<16x8xf32>
    %30 = vector.extract_strided_slice %13 {offsets = [0, 8], sizes = [16, 8], strides = [1, 1]} : vector<16x32xf32> to vector<16x8xf32>
    %31 = vector.extract_strided_slice %14 {offsets = [0, 8], sizes = [16, 8], strides = [1, 1]} : vector<16x32xf32> to vector<16x8xf32>
    %32 = vector.extract_strided_slice %15 {offsets = [0, 8], sizes = [16, 8], strides = [1, 1]} : vector<16x32xf32> to vector<16x8xf32>
    %cst_19 = arith.constant dense<0.000000e+00> : vector<16x16xf32>
    %33 = tpu.matmul %30, %31, %cst_19 {dimension_numbers = #tpu.dot_dimension_numbers<[1], [1], [0], [0], [0, 0, 1, 0], [], []>} : vector<16x8xf32>, vector<16x8xf32>, vector<16x16xf32> -> vector<16x16xf32>
    %cst_20 = arith.constant dense<0xFF800000> : vector<16xf32>
    %34 = vector.multi_reduction <maximumf>, %33, %cst_20 [1] : vector<16x16xf32> to vector<16xf32>
    %35 = vector.shape_cast %34 : vector<16xf32> to vector<16x1xf32>
    %36 = vector.broadcast %35 : vector<16x1xf32> to vector<16x16xf32>
    %37 = arith.subf %33, %36 : vector<16x16xf32>
    %38 = math.exp %37 : vector<16x16xf32>
    %cst_21 = arith.constant dense<0.000000e+00> : vector<16xf32>
    %39 = vector.multi_reduction <add>, %38, %cst_21 [1] : vector<16x16xf32> to vector<16xf32>
    %40 = vector.shape_cast %39 : vector<16xf32> to vector<16x1xf32>
    %41 = vector.broadcast %40 : vector<16x1xf32> to vector<16x16xf32>
    %42 = arith.divf %38, %41 : vector<16x16xf32>
    %cst_22 = arith.constant dense<0.000000e+00> : vector<16x8xf32>
    %43 = tpu.matmul %42, %32, %cst_22 {dimension_numbers = #tpu.dot_dimension_numbers<[1], [0], [0], [1], [0, 0, 1, 1], [], []>} : vector<16x16xf32>, vector<16x8xf32>, vector<16x8xf32> -> vector<16x8xf32>
    %44 = vector.extract_strided_slice %13 {offsets = [0, 16], sizes = [16, 8], strides = [1, 1]} : vector<16x32xf32> to vector<16x8xf32>
    %45 = vector.extract_strided_slice %14 {offsets = [0, 16], sizes = [16, 8], strides = [1, 1]} : vector<16x32xf32> to vector<16x8xf32>
    %46 = vector.extract_strided_slice %15 {offsets = [0, 16], sizes = [16, 8], strides = [1, 1]} : vector<16x32xf32> to vector<16x8xf32>
    %cst_23 = arith.constant dense<0.000000e+00> : vector<16x16xf32>
    %47 = tpu.matmul %44, %45, %cst_23 {dimension_numbers = #tpu.dot_dimension_numbers<[1], [1], [0], [0], [0, 0, 1, 0], [], []>} : vector<16x8xf32>, vector<16x8xf32>, vector<16x16xf32> -> vector<16x16xf32>
    %cst_24 = arith.constant dense<0xFF800000> : vector<16xf32>
    %48 = vector.multi_reduction <maximumf>, %47, %cst_24 [1] : vector<16x16xf32> to vector<16xf32>
    %49 = vector.shape_cast %48 : vector<16xf32> to vector<16x1xf32>
    %50 = vector.broadcast %49 : vector<16x1xf32> to vector<16x16xf32>
    %51 = arith.subf %47, %50 : vector<16x16xf32>
    %52 = math.exp %51 : vector<16x16xf32>
    %cst_25 = arith.constant dense<0.000000e+00> : vector<16xf32>
    %53 = vector.multi_reduction <add>, %52, %cst_25 [1] : vector<16x16xf32> to vector<16xf32>
    %54 = vector.shape_cast %53 : vector<16xf32> to vector<16x1xf32>
    %55 = vector.broadcast %54 : vector<16x1xf32> to vector<16x16xf32>
    %56 = arith.divf %52, %55 : vector<16x16xf32>
    %cst_26 = arith.constant dense<0.000000e+00> : vector<16x8xf32>
    %57 = tpu.matmul %56, %46, %cst_26 {dimension_numbers = #tpu.dot_dimension_numbers<[1], [0], [0], [1], [0, 0, 1, 1], [], []>} : vector<16x16xf32>, vector<16x8xf32>, vector<16x8xf32> -> vector<16x8xf32>
    %58 = vector.extract_strided_slice %13 {offsets = [0, 24], sizes = [16, 8], strides = [1, 1]} : vector<16x32xf32> to vector<16x8xf32>
    %59 = vector.extract_strided_slice %14 {offsets = [0, 24], sizes = [16, 8], strides = [1, 1]} : vector<16x32xf32> to vector<16x8xf32>
    %60 = vector.extract_strided_slice %15 {offsets = [0, 24], sizes = [16, 8], strides = [1, 1]} : vector<16x32xf32> to vector<16x8xf32>
    %cst_27 = arith.constant dense<0.000000e+00> : vector<16x16xf32>
    %61 = tpu.matmul %58, %59, %cst_27 {dimension_numbers = #tpu.dot_dimension_numbers<[1], [1], [0], [0], [0, 0, 1, 0], [], []>} : vector<16x8xf32>, vector<16x8xf32>, vector<16x16xf32> -> vector<16x16xf32>
    %cst_28 = arith.constant dense<0xFF800000> : vector<16xf32>
    %62 = vector.multi_reduction <maximumf>, %61, %cst_28 [1] : vector<16x16xf32> to vector<16xf32>
    %63 = vector.shape_cast %62 : vector<16xf32> to vector<16x1xf32>
    %64 = vector.broadcast %63 : vector<16x1xf32> to vector<16x16xf32>
    %65 = arith.subf %61, %64 : vector<16x16xf32>
    %66 = math.exp %65 : vector<16x16xf32>
    %cst_29 = arith.constant dense<0.000000e+00> : vector<16xf32>
    %67 = vector.multi_reduction <add>, %66, %cst_29 [1] : vector<16x16xf32> to vector<16xf32>
    %68 = vector.shape_cast %67 : vector<16xf32> to vector<16x1xf32>
    %69 = vector.broadcast %68 : vector<16x1xf32> to vector<16x16xf32>
    %70 = arith.divf %66, %69 : vector<16x16xf32>
    %cst_30 = arith.constant dense<0.000000e+00> : vector<16x8xf32>
    %71 = tpu.matmul %70, %60, %cst_30 {dimension_numbers = #tpu.dot_dimension_numbers<[1], [0], [0], [1], [0, 0, 1, 1], [], []>} : vector<16x16xf32>, vector<16x8xf32>, vector<16x8xf32> -> vector<16x8xf32>
    %72 = tpu.concatenate %29, %43, %57, %71 in 1 : vector<16x8xf32>, vector<16x8xf32>, vector<16x8xf32>, vector<16x8xf32> -> vector<16x32xf32>
    %cst_31 = arith.constant dense<0.000000e+00> : vector<16x32xf32>
    %73 = tpu.matmul %72, %2, %cst_31 {dimension_numbers = #tpu.dot_dimension_numbers<[1], [0], [0], [1], [0, 0, 1, 1], [], []>} : vector<16x32xf32>, vector<32x32xf32>, vector<16x32xf32> -> vector<16x32xf32>
    %74 = vector.broadcast %3 : vector<1x32xf32> to vector<16x32xf32>
    %75 = arith.addf %73, %74 : vector<16x32xf32>
    %cst_32 = arith.constant dense<0.000000e+00> : vector<16x32xf32>
    %76 = tpu.matmul %75, %4, %cst_32 {dimension_numbers = #tpu.dot_dimension_numbers<[1], [0], [0], [1], [0, 0, 1, 1], [], []>} : vector<16x32xf32>, vector<32x32xf32>, vector<16x32xf32> -> vector<16x32xf32>
    %77 = vector.broadcast %5 : vector<1x32xf32> to vector<16x32xf32>
    %78 = arith.addf %76, %77 : vector<16x32xf32>
    %c1 = arith.constant 1 : index
    %c0_33 = arith.constant 0 : index
    %c0_34 = arith.constant 0 : index
    %79 = vector.load %arg1[%c1, %c0_33, %c0_34] : memref<2x16x32xf32, #tpu.memory_space<vmem>>, vector<1x16x32xf32>
    %80 = vector.shape_cast %79 : vector<1x16x32xf32> to vector<16x32xf32>
    %cst_35 = arith.constant dense<0.000000e+00> : vector<16x96xf32>
    %81 = tpu.matmul %80, %0, %cst_35 {dimension_numbers = #tpu.dot_dimension_numbers<[1], [0], [0], [1], [0, 0, 1, 1], [], []>} : vector<16x32xf32>, vector<32x96xf32>, vector<16x96xf32> -> vector<16x96xf32>
    %82 = vector.broadcast %1 : vector<1x96xf32> to vector<16x96xf32>
    %83 = arith.addf %81, %82 : vector<16x96xf32>
    %84 = vector.extract_strided_slice %83 {offsets = [0, 0], sizes = [16, 32], strides = [1, 1]} : vector<16x96xf32> to vector<16x32xf32>
    %cst_36 = arith.constant 0.353553385 : f32
    %85 = vector.broadcast %cst_36 : f32 to vector<16x32xf32>
    %86 = arith.mulf %84, %85 : vector<16x32xf32>
    %87 = vector.extract_strided_slice %83 {offsets = [0, 32], sizes = [16, 32], strides = [1, 1]} : vector<16x96xf32> to vector<16x32xf32>
    %88 = vector.extract_strided_slice %83 {offsets = [0, 64], sizes = [16, 32], strides = [1, 1]} : vector<16x96xf32> to vector<16x32xf32>
    %89 = vector.extract_strided_slice %86 {offsets = [0, 0], sizes = [16, 8], strides = [1, 1]} : vector<16x32xf32> to vector<16x8xf32>
    %90 = vector.extract_strided_slice %87 {offsets = [0, 0], sizes = [16, 8], strides = [1, 1]} : vector<16x32xf32> to vector<16x8xf32>
    %91 = vector.extract_strided_slice %88 {offsets = [0, 0], sizes = [16, 8], strides = [1, 1]} : vector<16x32xf32> to vector<16x8xf32>
    %cst_37 = arith.constant dense<0.000000e+00> : vector<16x16xf32>
    %92 = tpu.matmul %89, %90, %cst_37 {dimension_numbers = #tpu.dot_dimension_numbers<[1], [1], [0], [0], [0, 0, 1, 0], [], []>} : vector<16x8xf32>, vector<16x8xf32>, vector<16x16xf32> -> vector<16x16xf32>
    %cst_38 = arith.constant dense<0xFF800000> : vector<16xf32>
    %93 = vector.multi_reduction <maximumf>, %92, %cst_38 [1] : vector<16x16xf32> to vector<16xf32>
    %94 = vector.shape_cast %93 : vector<16xf32> to vector<16x1xf32>
    %95 = vector.broadcast %94 : vector<16x1xf32> to vector<16x16xf32>
    %96 = arith.subf %92, %95 : vector<16x16xf32>
    %97 = math.exp %96 : vector<16x16xf32>
    %cst_39 = arith.constant dense<0.000000e+00> : vector<16xf32>
    %98 = vector.multi_reduction <add>, %97, %cst_39 [1] : vector<16x16xf32> to vector<16xf32>
    %99 = vector.shape_cast %98 : vector<16xf32> to vector<16x1xf32>
    %100 = vector.broadcast %99 : vector<16x1xf32> to vector<16x16xf32>
    %101 = arith.divf %97, %100 : vector<16x16xf32>
    %cst_40 = arith.constant dense<0.000000e+00> : vector<16x8xf32>
    %102 = tpu.matmul %101, %91, %cst_40 {dimension_numbers = #tpu.dot_dimension_numbers<[1], [0], [0], [1], [0, 0, 1, 1], [], []>} : vector<16x16xf32>, vector<16x8xf32>, vector<16x8xf32> -> vector<16x8xf32>
    %103 = vector.extract_strided_slice %86 {offsets = [0, 8], sizes = [16, 8], strides = [1, 1]} : vector<16x32xf32> to vector<16x8xf32>
    %104 = vector.extract_strided_slice %87 {offsets = [0, 8], sizes = [16, 8], strides = [1, 1]} : vector<16x32xf32> to vector<16x8xf32>
    %105 = vector.extract_strided_slice %88 {offsets = [0, 8], sizes = [16, 8], strides = [1, 1]} : vector<16x32xf32> to vector<16x8xf32>
    %cst_41 = arith.constant dense<0.000000e+00> : vector<16x16xf32>
    %106 = tpu.matmul %103, %104, %cst_41 {dimension_numbers = #tpu.dot_dimension_numbers<[1], [1], [0], [0], [0, 0, 1, 0], [], []>} : vector<16x8xf32>, vector<16x8xf32>, vector<16x16xf32> -> vector<16x16xf32>
    %cst_42 = arith.constant dense<0xFF800000> : vector<16xf32>
    %107 = vector.multi_reduction <maximumf>, %106, %cst_42 [1] : vector<16x16xf32> to vector<16xf32>
    %108 = vector.shape_cast %107 : vector<16xf32> to vector<16x1xf32>
    %109 = vector.broadcast %108 : vector<16x1xf32> to vector<16x16xf32>
    %110 = arith.subf %106, %109 : vector<16x16xf32>
    %111 = math.exp %110 : vector<16x16xf32>
    %cst_43 = arith.constant dense<0.000000e+00> : vector<16xf32>
    %112 = vector.multi_reduction <add>, %111, %cst_43 [1] : vector<16x16xf32> to vector<16xf32>
    %113 = vector.shape_cast %112 : vector<16xf32> to vector<16x1xf32>
    %114 = vector.broadcast %113 : vector<16x1xf32> to vector<16x16xf32>
    %115 = arith.divf %111, %114 : vector<16x16xf32>
    %cst_44 = arith.constant dense<0.000000e+00> : vector<16x8xf32>
    %116 = tpu.matmul %115, %105, %cst_44 {dimension_numbers = #tpu.dot_dimension_numbers<[1], [0], [0], [1], [0, 0, 1, 1], [], []>} : vector<16x16xf32>, vector<16x8xf32>, vector<16x8xf32> -> vector<16x8xf32>
    %117 = vector.extract_strided_slice %86 {offsets = [0, 16], sizes = [16, 8], strides = [1, 1]} : vector<16x32xf32> to vector<16x8xf32>
    %118 = vector.extract_strided_slice %87 {offsets = [0, 16], sizes = [16, 8], strides = [1, 1]} : vector<16x32xf32> to vector<16x8xf32>
    %119 = vector.extract_strided_slice %88 {offsets = [0, 16], sizes = [16, 8], strides = [1, 1]} : vector<16x32xf32> to vector<16x8xf32>
    %cst_45 = arith.constant dense<0.000000e+00> : vector<16x16xf32>
    %120 = tpu.matmul %117, %118, %cst_45 {dimension_numbers = #tpu.dot_dimension_numbers<[1], [1], [0], [0], [0, 0, 1, 0], [], []>} : vector<16x8xf32>, vector<16x8xf32>, vector<16x16xf32> -> vector<16x16xf32>
    %cst_46 = arith.constant dense<0xFF800000> : vector<16xf32>
    %121 = vector.multi_reduction <maximumf>, %120, %cst_46 [1] : vector<16x16xf32> to vector<16xf32>
    %122 = vector.shape_cast %121 : vector<16xf32> to vector<16x1xf32>
    %123 = vector.broadcast %122 : vector<16x1xf32> to vector<16x16xf32>
    %124 = arith.subf %120, %123 : vector<16x16xf32>
    %125 = math.exp %124 : vector<16x16xf32>
    %cst_47 = arith.constant dense<0.000000e+00> : vector<16xf32>
    %126 = vector.multi_reduction <add>, %125, %cst_47 [1] : vector<16x16xf32> to vector<16xf32>
    %127 = vector.shape_cast %126 : vector<16xf32> to vector<16x1xf32>
    %128 = vector.broadcast %127 : vector<16x1xf32> to vector<16x16xf32>
    %129 = arith.divf %125, %128 : vector<16x16xf32>
    %cst_48 = arith.constant dense<0.000000e+00> : vector<16x8xf32>
    %130 = tpu.matmul %129, %119, %cst_48 {dimension_numbers = #tpu.dot_dimension_numbers<[1], [0], [0], [1], [0, 0, 1, 1], [], []>} : vector<16x16xf32>, vector<16x8xf32>, vector<16x8xf32> -> vector<16x8xf32>
    %131 = vector.extract_strided_slice %86 {offsets = [0, 24], sizes = [16, 8], strides = [1, 1]} : vector<16x32xf32> to vector<16x8xf32>
    %132 = vector.extract_strided_slice %87 {offsets = [0, 24], sizes = [16, 8], strides = [1, 1]} : vector<16x32xf32> to vector<16x8xf32>
    %133 = vector.extract_strided_slice %88 {offsets = [0, 24], sizes = [16, 8], strides = [1, 1]} : vector<16x32xf32> to vector<16x8xf32>
    %cst_49 = arith.constant dense<0.000000e+00> : vector<16x16xf32>
    %134 = tpu.matmul %131, %132, %cst_49 {dimension_numbers = #tpu.dot_dimension_numbers<[1], [1], [0], [0], [0, 0, 1, 0], [], []>} : vector<16x8xf32>, vector<16x8xf32>, vector<16x16xf32> -> vector<16x16xf32>
    %cst_50 = arith.constant dense<0xFF800000> : vector<16xf32>
    %135 = vector.multi_reduction <maximumf>, %134, %cst_50 [1] : vector<16x16xf32> to vector<16xf32>
    %136 = vector.shape_cast %135 : vector<16xf32> to vector<16x1xf32>
    %137 = vector.broadcast %136 : vector<16x1xf32> to vector<16x16xf32>
    %138 = arith.subf %134, %137 : vector<16x16xf32>
    %139 = math.exp %138 : vector<16x16xf32>
    %cst_51 = arith.constant dense<0.000000e+00> : vector<16xf32>
    %140 = vector.multi_reduction <add>, %139, %cst_51 [1] : vector<16x16xf32> to vector<16xf32>
    %141 = vector.shape_cast %140 : vector<16xf32> to vector<16x1xf32>
    %142 = vector.broadcast %141 : vector<16x1xf32> to vector<16x16xf32>
    %143 = arith.divf %139, %142 : vector<16x16xf32>
    %cst_52 = arith.constant dense<0.000000e+00> : vector<16x8xf32>
    %144 = tpu.matmul %143, %133, %cst_52 {dimension_numbers = #tpu.dot_dimension_numbers<[1], [0], [0], [1], [0, 0, 1, 1], [], []>} : vector<16x16xf32>, vector<16x8xf32>, vector<16x8xf32> -> vector<16x8xf32>
    %145 = tpu.concatenate %102, %116, %130, %144 in 1 : vector<16x8xf32>, vector<16x8xf32>, vector<16x8xf32>, vector<16x8xf32> -> vector<16x32xf32>
    %cst_53 = arith.constant dense<0.000000e+00> : vector<16x32xf32>
    %146 = tpu.matmul %145, %2, %cst_53 {dimension_numbers = #tpu.dot_dimension_numbers<[1], [0], [0], [1], [0, 0, 1, 1], [], []>} : vector<16x32xf32>, vector<32x32xf32>, vector<16x32xf32> -> vector<16x32xf32>
    %147 = vector.broadcast %3 : vector<1x32xf32> to vector<16x32xf32>
    %148 = arith.addf %146, %147 : vector<16x32xf32>
    %cst_54 = arith.constant dense<0.000000e+00> : vector<16x32xf32>
    %149 = tpu.matmul %148, %4, %cst_54 {dimension_numbers = #tpu.dot_dimension_numbers<[1], [0], [0], [1], [0, 0, 1, 1], [], []>} : vector<16x32xf32>, vector<32x32xf32>, vector<16x32xf32> -> vector<16x32xf32>
    %150 = vector.broadcast %5 : vector<1x32xf32> to vector<16x32xf32>
    %151 = arith.addf %149, %150 : vector<16x32xf32>
    %152 = tpu.concatenate %78, %151 in 0 : vector<16x32xf32>, vector<16x32xf32> -> vector<32x32xf32>
    %153 = tpu.concatenate %7, %80 in 0 : vector<16x32xf32>, vector<16x32xf32> -> vector<32x32xf32>
    %cst_55 = arith.constant dense<0.000000e+00> : vector<32xf32>
    %154 = vector.multi_reduction <add>, %152, %cst_55 [0] : vector<32x32xf32> to vector<32xf32>
    %155 = vector.shape_cast %154 : vector<32xf32> to vector<1x32xf32>
    %cst_56 = arith.constant 3.200000e+01 : f32
    %156 = vector.broadcast %cst_56 : f32 to vector<1x32xf32>
    %157 = arith.divf %155, %156 : vector<1x32xf32>
    %158 = vector.broadcast %157 : vector<1x32xf32> to vector<32x32xf32>
    %159 = arith.subf %152, %158 : vector<32x32xf32>
    %160 = arith.mulf %159, %159 : vector<32x32xf32>
    %cst_57 = arith.constant dense<0.000000e+00> : vector<32xf32>
    %161 = vector.multi_reduction <add>, %160, %cst_57 [0] : vector<32x32xf32> to vector<32xf32>
    %162 = vector.shape_cast %161 : vector<32xf32> to vector<1x32xf32>
    %cst_58 = arith.constant 3.200000e+01 : f32
    %163 = vector.broadcast %cst_58 : f32 to vector<1x32xf32>
    %164 = arith.divf %162, %163 : vector<1x32xf32>
    %cst_59 = arith.constant 9.99999974E-6 : f32
    %165 = vector.broadcast %cst_59 : f32 to vector<1x32xf32>
    %166 = arith.addf %164, %165 : vector<1x32xf32>
    %167 = math.rsqrt %166 : vector<1x32xf32>
    %168 = vector.broadcast %167 : vector<1x32xf32> to vector<32x32xf32>
    %169 = arith.mulf %159, %168 : vector<32x32xf32>
    %c0_60 = arith.constant 0 : index
    %c0_61 = arith.constant 0 : index
    %170 = vector.load %arg8[%c0_60, %c0_61] : memref<1x32xf32, #tpu.memory_space<vmem>>, vector<1x32xf32>
    %171 = vector.broadcast %170 : vector<1x32xf32> to vector<32x32xf32>
    %172 = arith.mulf %169, %171 : vector<32x32xf32>
    %c0_62 = arith.constant 0 : index
    %c0_63 = arith.constant 0 : index
    %173 = vector.load %arg9[%c0_62, %c0_63] : memref<1x32xf32, #tpu.memory_space<vmem>>, vector<1x32xf32>
    %174 = vector.broadcast %173 : vector<1x32xf32> to vector<32x32xf32>
    %175 = arith.addf %172, %174 : vector<32x32xf32>
    %176 = arith.addf %175, %153 : vector<32x32xf32>
    %177 = vector.extract_strided_slice %176 {offsets = [0, 0], sizes = [16, 32], strides = [1, 1]} : vector<32x32xf32> to vector<16x32xf32>
    %c0_64 = arith.constant 0 : index
    %c0_65 = arith.constant 0 : index
    %c0_66 = arith.constant 0 : index
    %178 = vector.load %arg10[%c0_64, %c0_65, %c0_66] : memref<2x16x32xf32, #tpu.memory_space<vmem>>, vector<1x16x32xf32>
    %179 = vector.shape_cast %178 : vector<1x16x32xf32> to vector<16x32xf32>
    %180 = vector.shape_cast %177 : vector<16x32xf32> to vector<1x16x32xf32>
    tpu.vector_store %arg10[%c0_64, %c0_65, %c0_66], %180 {strides = array<i32>} : memref<2x16x32xf32, #tpu.memory_space<vmem>>, vector<1x16x32xf32>,
    %181 = vector.extract_strided_slice %176 {offsets = [16, 0], sizes = [16, 32], strides = [1, 1]} : vector<32x32xf32> to vector<16x32xf32>
    %c1_67 = arith.constant 1 : index
    %c0_68 = arith.constant 0 : index
    %c0_69 = arith.constant 0 : index
    %182 = vector.load %arg10[%c1_67, %c0_68, %c0_69] : memref<2x16x32xf32, #tpu.memory_space<vmem>>, vector<1x16x32xf32>
    %183 = vector.shape_cast %182 : vector<1x16x32xf32> to vector<16x32xf32>
    %184 = vector.shape_cast %181 : vector<16x32xf32> to vector<1x16x32xf32>
    tpu.vector_store %arg10[%c1_67, %c0_68, %c0_69], %184 {strides = array<i32>} : memref<2x16x32xf32, #tpu.memory_space<vmem>>, vector<1x16x32xf32>,
    return
  }
  func.func @transform_0(%arg0: i32) -> (i32, i32, i32) {
    %c0_i32 = arith.constant 0 : i32
    %c0_i32_0 = arith.constant 0 : i32
    %c0_i32_1 = arith.constant 0 : i32
    %c0_i32_2 = arith.constant 0 : i32
    return %c0_i32, %c0_i32_0, %c0_i32_1 : i32, i32, i32
  }
  func.func @transform_1(%arg0: i32) -> (i32, i32) {
    %c0_i32 = arith.constant 0 : i32
    %c0_i32_0 = arith.constant 0 : i32
    %c0_i32_1 = arith.constant 0 : i32
    return %c0_i32, %c0_i32_0 : i32, i32
  }
  func.func @transform_2(%arg0: i32) -> (i32, i32) {
    %c0_i32 = arith.constant 0 : i32
    %c0_i32_0 = arith.constant 0 : i32
    %c0_i32_1 = arith.constant 0 : i32
    return %c0_i32, %c0_i32_0 : i32, i32
  }
  func.func @transform_3(%arg0: i32) -> (i32, i32) {
    %c0_i32 = arith.constant 0 : i32
    %c0_i32_0 = arith.constant 0 : i32
    %c0_i32_1 = arith.constant 0 : i32
    return %c0_i32, %c0_i32_0 : i32, i32
  }
  func.func @transform_4(%arg0: i32) -> (i32, i32) {
    %c0_i32 = arith.constant 0 : i32
    %c0_i32_0 = arith.constant 0 : i32
    %c0_i32_1 = arith.constant 0 : i32
    return %c0_i32, %c0_i32_0 : i32, i32
  }
  func.func @transform_5(%arg0: i32) -> (i32, i32) {
    %c0_i32 = arith.constant 0 : i32
    %c0_i32_0 = arith.constant 0 : i32
    %c0_i32_1 = arith.constant 0 : i32
    return %c0_i32, %c0_i32_0 : i32, i32
  }
  func.func @transform_6(%arg0: i32) -> (i32, i32) {
    %c0_i32 = arith.constant 0 : i32
    %c0_i32_0 = arith.constant 0 : i32
    %c0_i32_1 = arith.constant 0 : i32
    return %c0_i32, %c0_i32_0 : i32, i32
  }
  func.func @transform_7(%arg0: i32) -> (i32, i32) {
    %c0_i32 = arith.constant 0 : i32
    %c0_i32_0 = arith.constant 0 : i32
    %c0_i32_1 = arith.constant 0 : i32
    return %c0_i32, %c0_i32_0 : i32, i32
  }
  func.func @transform_8(%arg0: i32) -> (i32, i32) {
    %c0_i32 = arith.constant 0 : i32
    %c0_i32_0 = arith.constant 0 : i32
    %c0_i32_1 = arith.constant 0 : i32
    return %c0_i32, %c0_i32_0 : i32, i32
  }
  func.func @transform_9(%arg0: i32) -> (i32, i32, i32) {
    %c0_i32 = arith.constant 0 : i32
    %c0_i32_0 = arith.constant 0 : i32
    %c0_i32_1 = arith.constant 0 : i32
    %c0_i32_2 = arith.constant 0 : i32
    return %c0_i32, %c0_i32_0, %c0_i32_1 : i32, i32, i32
  }
}

</mosaic_0001>

<llo_original>
// kernel: interpolate_forward.1
$region0: #{interpolate_forward.1}
  #allocation0 [shape = 'u32[]', space=smem, size = 0x4, offset = 0x4, fixed_abs, tag = 'smem constant byte address 0x4 - core index']
  #allocation1 [shape = 'u32[72,128]{1,0:T(1,128)}', space=vmem, size = 0x9000, scoped, tag = 'internal scratch']
  %s0 = inlined_call_operand.vmem [shape: f32[2,16,32], index: 0, kind: input, shape index: {}]
  %s1 = inlined_call_operand.vmem [shape: f32[32,96], index: 1, kind: input, shape index: {}]
  %s2 = inlined_call_operand.vmem [shape: f32[1,96], index: 2, kind: input, shape index: {}]
  %s3 = inlined_call_operand.vmem [shape: f32[32,32], index: 3, kind: input, shape index: {}]
  %s4 = inlined_call_operand.vmem [shape: f32[1,32], index: 4, kind: input, shape index: {}]
  %s5 = inlined_call_operand.vmem [shape: f32[32,32], index: 5, kind: input, shape index: {}]
  %s6 = inlined_call_operand.vmem [shape: f32[1,32], index: 6, kind: input, shape index: {}]
  %s7 = inlined_call_operand.vmem [shape: f32[1,32], index: 7, kind: input, shape index: {}]
  %s8 = inlined_call_operand.vmem [shape: f32[1,32], index: 8, kind: input, shape index: {}]
  %s9 = inlined_call_operand.hbm [shape: f32[2,16,32], index: 9, kind: output, shape index: {}]
  %s10 = sld [smem:[#allocation0]]
  $region46: #{interpolate_forward.1} parent=0
    _
  %s12 = ssub.s32 1, %s10
  %s13 = scalar_select 0, %s12, %s10
  $region1: #{interpolate_forward.1} parent=0
    #allocation2 [shape = 'u8[16384]{0}', space=vmem, size = 0x4000, scoped, tag = 'output window, operand 0, single buffered']
    #allocation3 [shape = 's32[1]{0}', space=sflag, size = 0x4, scoped, tag = 'scoped memory for interpolate_forward.1']
    %14 = vsyncpa [#allocation3], 0
    // Predicated region
    $region2: #{interpolate_forward.1} parent=1 // pred_check
      _
    $region3: #{interpolate_forward.1} parent=1 // pred_check_branch
      %16 = sbr.rel (0) target = $region5
    $region4: #{interpolate_forward.1} parent=1 // pred_region
      _
    $region5: #{interpolate_forward.1} parent=1 // pred_fallthru
      _
    // Predicated region
    $region6: #{interpolate_forward.1} parent=1 // pred_check
      _
    $region7: #{interpolate_forward.1} parent=1 // pred_check_branch
      %18 = sbr.rel (0) target = $region9
    $region8: #{interpolate_forward.1} parent=1 // pred_region
      _
    $region9: #{interpolate_forward.1} parent=1 // pred_fallthru
      _
    // Predicated region
    $region10: #{interpolate_forward.1} parent=1 // pred_check
      _
    $region11: #{interpolate_forward.1} parent=1 // pred_check_branch
      %20 = sbr.rel (0) target = $region13
    $region12: #{interpolate_forward.1} parent=1 // pred_region
      _
    $region13: #{interpolate_forward.1} parent=1 // pred_fallthru
      _
    // Predicated region
    $region14: #{interpolate_forward.1} parent=1 // pred_check
      _
    $region15: #{interpolate_forward.1} parent=1 // pred_check_branch
      %22 = sbr.rel (0) target = $region17
    $region16: #{interpolate_forward.1} parent=1 // pred_region
      _
    $region17: #{interpolate_forward.1} parent=1 // pred_fallthru
      _
    // Predicated region
    $region18: #{interpolate_forward.1} parent=1 // pred_check
      _
    $region19: #{interpolate_forward.1} parent=1 // pred_check_branch
      %24 = sbr.rel (0) target = $region21
    $region20: #{interpolate_forward.1} parent=1 // pred_region
      _
    $region21: #{interpolate_forward.1} parent=1 // pred_fallthru
      _
    // Predicated region
    $region22: #{interpolate_forward.1} parent=1 // pred_check
      _
    $region23: #{interpolate_forward.1} parent=1 // pred_check_branch
      %26 = sbr.rel (0) target = $region25
    $region24: #{interpolate_forward.1} parent=1 // pred_region
      _
    $region25: #{interpolate_forward.1} parent=1 // pred_fallthru
      _
    // Predicated region
    $region26: #{interpolate_forward.1} parent=1 // pred_check
      _
    $region27: #{interpolate_forward.1} parent=1 // pred_check_branch
      %28 = sbr.rel (0) target = $region29
    $region28: #{interpolate_forward.1} parent=1 // pred_region
      _
    $region29: #{interpolate_forward.1} parent=1 // pred_fallthru
      _
    // Predicated region
    $region30: #{interpolate_forward.1} parent=1 // pred_check
      _
    $region31: #{interpolate_forward.1} parent=1 // pred_check_branch
      %30 = sbr.rel (0) target = $region33
    $region32: #{interpolate_forward.1} parent=1 // pred_region
      _
    $region33: #{interpolate_forward.1} parent=1 // pred_fallthru
      _
    // Predicated region
    $region34: #{interpolate_forward.1} parent=1 // pred_check
      _
    $region35: #{interpolate_forward.1} parent=1 // pred_check_branch
      %32 = sbr.rel (0) target = $region37
    $region36: #{interpolate_forward.1} parent=1 // pred_region
      _
    $region37: #{interpolate_forward.1} parent=1 // pred_fallthru
      _
    %v33 = vld [vmem:[%s1] sm:$0xff]
    %v34 = vld [vmem:[%s1 + $0x8] sm:$0xff]
    %v35 = vld [vmem:[%s1 + $0x10] sm:$0xff]
    %v36 = vld [vmem:[%s1 + $0x18] sm:$0xff]
    %v37 = vld [vmem:[%s2] sm:$0x1]
    %v38 = vld [vmem:[%s3] sm:$0xff]
    %v39 = vld [vmem:[%s3 + $0x8] sm:$0xff]
    %v40 = vld [vmem:[%s3 + $0x10] sm:$0xff]
    %v41 = vld [vmem:[%s3 + $0x18] sm:$0xff]
    %v42 = vld [vmem:[%s4] sm:$0x1]
    %v43 = vld [vmem:[%s5] sm:$0xff]
    %v44 = vld [vmem:[%s5 + $0x8] sm:$0xff]
    %v45 = vld [vmem:[%s5 + $0x10] sm:$0xff]
    %v46 = vld [vmem:[%s5 + $0x18] sm:$0xff]
    %v47 = vld [vmem:[%s6] sm:$0x1]
    %v48 = vld [vmem:[%s0] sm:$0xff]
    %v49 = vld [vmem:[%s0 + $0x8] sm:$0xff]
    %v51 = vperm.slane %v37, 0
    %vm53 = vcmask 261120
    %v55 = vsel %vm53, %v48, 0
    %v58 = vsel %vm53, %v49, 0
    %60 = vmatpush.msra.mxu0 0.0
    %61 = vmatpush.msra.mxu0 0.0
    %62 = vmatpush.msra.mxu0 0.0
    %63 = vmatpush.msra.mxu0 0.0
    %64 = vmatpush.msra.mxu0 0.0
    %65 = vmatpush.msra.mxu0 0.0
    %66 = vmatpush.msra.mxu0 0.0
    %67 = vmatpush.msra.mxu0 0.0
    %68 = vmatpush.msra.mxu0 0.0
    %69 = vmatpush.msra.mxu0 0.0
    %70 = vmatpush.msra.mxu0 0.0
    %71 = vmatpush.msra.mxu0 0.0
    %72 = vmatpush.msra.mxu0 %v36
    %73 = vmatpush.msra.mxu0 %v35
    %74 = vmatpush.msra.mxu0 %v34
    %75 = vmatpush.msra.mxu0 %v33
    %76 = vmatmul.f32.gmra.mxu0 %v55
    %v77 = vpop.f32.mrf.mxu0
    %v78 = vadd.f32 %v51, %v77
    %79 = vmatmul.f32.gmra.mxu0 %v58
    %v80 = vpop.f32.mrf.mxu0
    %v81 = vadd.f32 %v51, %v80
    %82 = vdwg.mxu0
    %v83 = vmul.f32 %v78, 0.35355338
    %v84 = vmul.f32 %v81, 0.35355338
    %87 = vrot.lane.b32.xlu0 %v78, 96
    %v88 = vpop.permute.xlu0 %87
    %89 = vrot.lane.b32.xlu0 %v81, 96
    %v90 = vpop.permute.xlu0 %89
    %vm91 = vcmask 64512
    %v93 = vsel %vm91, %v83, 0
    %v96 = vsel %vm91, %v84, 0
    %v98 = vsel %vm91, %v88, 0
    %v100 = vsel %vm91, %v90, 0
    %102 = vmatpush.xpose.msra.mxu0 0.0
    %103 = vmatpush.xpose.msra.mxu0 0.0
    %104 = vmatpush.xpose.msra.mxu0 0.0
    %105 = vmatpush.xpose.msra.mxu0 0.0
    %106 = vmatpush.xpose.msra.mxu0 0.0
    %107 = vmatpush.xpose.msra.mxu0 0.0
    %108 = vmatpush.xpose.msra.mxu0 0.0
    %109 = vmatpush.xpose.msra.mxu0 0.0
    %110 = vmatpush.xpose.msra.mxu0 0.0
    %111 = vmatpush.xpose.msra.mxu0 0.0
    %112 = vmatpush.xpose.msra.mxu0 0.0
    %113 = vmatpush.xpose.msra.mxu0 0.0
    %114 = vmatpush.xpose.msra.mxu0 0.0
    %115 = vmatpush.xpose.msra.mxu0 0.0
    %116 = vmatpush.xpose.msra.mxu0 %v100
    %117 = vmatpush.xpose.msra.mxu0 %v98
    %118 = vmatmul.f32.gmra.mxu0 %v93
    %v119 = vpop.f32.mrf.mxu0
    %v120 = vadd.f32 0.0, %v119
    %121 = vmatmul.f32.gmra.mxu0 %v96
    %v122 = vpop.f32.mrf.mxu0
    %v123 = vadd.f32 0.0, %v122
    %124 = vdwg.mxu0
    %vm125 = vcmask 130048
    %v126 = vsel %vm125, %v120, -inf
    %127 = vmax.xlane.f32.xlu0 %v126
    %v128 = vpop.xlane.xlu0 %127
    %v129 = vsel %vm125, %v123, -inf
    %130 = vmax.xlane.f32.xlu0 %v129
    %v131 = vpop.xlane.xlu0 %130
    %v132 = vsub.f32 %v120, %v128
    %v133 = vsub.f32 %v123, %v131
    %v134 = vmul.f32 %v132, 1.442695
    %v135 = vpow.pop %v134
    %v136 = vmul.f32 %v133, 1.442695
    %v137 = vpow.pop %v136
    %v138 = vsel %vm125, %v135, 0.0
    %139 = vadd.xlane.f32.xlu0 %v138
    %v140 = vpop.xlane.xlu0 %139
    %v141 = vsel %vm125, %v137, 0.0
    %142 = vadd.xlane.f32.xlu0 %v141
    %v143 = vpop.xlane.xlu0 %142
    %v144 = vrcp.pop %v140
    %v145 = vmul.f32 %v140, %v144
    %v146 = vsub.f32 1.0, %v145
    %v147 = vmul.f32 %v144, %v146
    %v148 = vadd.f32 %v144, %v147
    %vm149 = vweird.f32 %v140
    %vm150 = vweird.f32 %v144
    %vm151 = vmor %vm149, %vm150
    %v152 = vsel %vm151, %v144, %v148
    %v153 = vand.u32 2147483647, %v140
    %vm154 = vcmp.eq.f32.partialorder %v153, 8.507059e+37
    %v155 = vand.u32 %v140, 2147483648
    %v156 = vor.u32 1.1754944e-38, %v155
    %v157 = vsel %vm154, %v156, %v152
    %v158 = vmul.f32 %v135, %v157
    %v159 = vrcp.pop %v143
    %v160 = vmul.f32 %v143, %v159
    %v161 = vsub.f32 1.0, %v160
    %v162 = vmul.f32 %v159, %v161
    %v163 = vadd.f32 %v159, %v162
    %vm164 = vweird.f32 %v143
    %vm165 = vweird.f32 %v159
    %vm166 = vmor %vm164, %vm165
    %v167 = vsel %vm166, %v159, %v163
    %v168 = vand.u32 2147483647, %v143
    %vm169 = vcmp.eq.f32.partialorder %v168, 8.507059e+37
    %v170 = vand.u32 %v143, 2147483648
    %v171 = vor.u32 1.1754944e-38, %v170
    %v172 = vsel %vm169, %v171, %v167
    %v173 = vmul.f32 %v137, %v172
    %174 = vrot.lane.b32.xlu0 %v78, 64
    %v175 = vpop.permute.xlu0 %174
    %176 = vrot.lane.b32.xlu0 %v81, 64
    %v177 = vpop.permute.xlu0 %176
    %v181 = vsel %vm125, %v158, 0
    %v184 = vsel %vm125, %v173, 0
    %186 = vmatpush.msra.mxu0 0.0
    %187 = vmatpush.msra.mxu0 0.0
    %188 = vmatpush.msra.mxu0 0.0
    %189 = vmatpush.msra.mxu0 0.0
    %190 = vmatpush.msra.mxu0 0.0
    %191 = vmatpush.msra.mxu0 0.0
    %192 = vmatpush.msra.mxu0 0.0
    %193 = vmatpush.msra.mxu0 0.0
    %194 = vmatpush.msra.mxu0 0.0
    %195 = vmatpush.msra.mxu0 0.0
    %196 = vmatpush.msra.mxu0 0.0
    %197 = vmatpush.msra.mxu0 0.0
    %198 = vmatpush.msra.mxu0 0.0
    %199 = vmatpush.msra.mxu0 0.0
    %200 = vmatpush.msra.mxu0 %v177
    %201 = vmatpush.msra.mxu0 %v175
    %202 = vmatmul.f32.gmra.mxu0 %v181
    %v203 = vpop.f32.mrf.mxu0
    %v204 = vadd.f32 0.0, %v203
    %205 = vmatmul.f32.gmra.mxu0 %v184
    %v206 = vpop.f32.mrf.mxu0
    %v207 = vadd.f32 0.0, %v206
    %208 = vdwg.mxu0
    %209 = vrot.lane.b32.xlu0 %v83, 120
    %v210 = vpop.permute.xlu0 %209
    %211 = vrot.lane.b32.xlu0 %v84, 120
    %v212 = vpop.permute.xlu0 %211
    %213 = vrot.lane.b32.xlu0 %v78, 88
    %v214 = vpop.permute.xlu0 %213
    %215 = vrot.lane.b32.xlu0 %v81, 88
    %v216 = vpop.permute.xlu0 %215
    %v217 = vsel %vm91, %v210, 0
    %v219 = vsel %vm91, %v212, 0
    %v221 = vsel %vm91, %v214, 0
    %v223 = vsel %vm91, %v216, 0
    %225 = vmatpush.xpose.msra.mxu0 0.0
    %226 = vmatpush.xpose.msra.mxu0 0.0
    %227 = vmatpush.xpose.msra.mxu0 0.0
    %228 = vmatpush.xpose.msra.mxu0 0.0
    %229 = vmatpush.xpose.msra.mxu0 0.0
    %230 = vmatpush.xpose.msra.mxu0 0.0
    %231 = vmatpush.xpose.msra.mxu0 0.0
    %232 = vmatpush.xpose.msra.mxu0 0.0
    %233 = vmatpush.xpose.msra.mxu0 0.0
    %234 = vmatpush.xpose.msra.mxu0 0.0
    %235 = vmatpush.xpose.msra.mxu0 0.0
    %236 = vmatpush.xpose.msra.mxu0 0.0
    %237 = vmatpush.xpose.msra.mxu0 0.0
    %238 = vmatpush.xpose.msra.mxu0 0.0
    %239 = vmatpush.xpose.msra.mxu0 %v223
    %240 = vmatpush.xpose.msra.mxu0 %v221
    %241 = vmatmul.f32.gmra.mxu0 %v217
    %v242 = vpop.f32.mrf.mxu0
    %v243 = vadd.f32 0.0, %v242
    %244 = vmatmul.f32.gmra.mxu0 %v219
    %v245 = vpop.f32.mrf.mxu0
    %v246 = vadd.f32 0.0, %v245
    %247 = vdwg.mxu0
    %v248 = vsel %vm125, %v243, -inf
    %249 = vmax.xlane.f32.xlu0 %v248
    %v250 = vpop.xlane.xlu0 %249
    %v251 = vsel %vm125, %v246, -inf
    %252 = vmax.xlane.f32.xlu0 %v251
    %v253 = vpop.xlane.xlu0 %252
    %v254 = vsub.f32 %v243, %v250
    %v255 = vsub.f32 %v246, %v253
    %v256 = vmul.f32 %v254, 1.442695
    %v257 = vpow.pop %v256
    %v258 = vmul.f32 %v255, 1.442695
    %v259 = vpow.pop %v258
    %v260 = vsel %vm125, %v257, 0.0
    %261 = vadd.xlane.f32.xlu0 %v260
    %v262 = vpop.xlane.xlu0 %261
    %v263 = vsel %vm125, %v259, 0.0
    %264 = vadd.xlane.f32.xlu0 %v263
    %v265 = vpop.xlane.xlu0 %264
    %v266 = vrcp.pop %v262
    %v267 = vmul.f32 %v262, %v266
    %v268 = vsub.f32 1.0, %v267
    %v269 = vmul.f32 %v266, %v268
    %v270 = vadd.f32 %v266, %v269
    %vm271 = vweird.f32 %v262
    %vm272 = vweird.f32 %v266
    %vm273 = vmor %vm271, %vm272
    %v274 = vsel %vm273, %v266, %v270
    %v275 = vand.u32 2147483647, %v262
    %vm276 = vcmp.eq.f32.partialorder %v275, 8.507059e+37
    %v277 = vand.u32 %v262, 2147483648
    %v278 = vor.u32 1.1754944e-38, %v277
    %v279 = vsel %vm276, %v278, %v274
    %v280 = vmul.f32 %v257, %v279
    %v281 = vrcp.pop %v265
    %v282 = vmul.f32 %v265, %v281
    %v283 = vsub.f32 1.0, %v282
    %v284 = vmul.f32 %v281, %v283
    %v285 = vadd.f32 %v281, %v284
    %vm286 = vweird.f32 %v265
    %vm287 = vweird.f32 %v281
    %vm288 = vmor %vm286, %vm287
    %v289 = vsel %vm288, %v281, %v285
    %v290 = vand.u32 2147483647, %v265
    %vm291 = vcmp.eq.f32.partialorder %v290, 8.507059e+37
    %v292 = vand.u32 %v265, 2147483648
    %v293 = vor.u32 1.1754944e-38, %v292
    %v294 = vsel %vm291, %v293, %v289
    %v295 = vmul.f32 %v259, %v294
    %296 = vrot.lane.b32.xlu0 %v78, 56
    %v297 = vpop.permute.xlu0 %296
    %298 = vrot.lane.b32.xlu0 %v81, 56
    %v299 = vpop.permute.xlu0 %298
    %v303 = vsel %vm125, %v280, 0
    %v306 = vsel %vm125, %v295, 0
    %308 = vmatpush.msra.mxu0 0.0
    %309 = vmatpush.msra.mxu0 0.0
    %310 = vmatpush.msra.mxu0 0.0
    %311 = vmatpush.msra.mxu0 0.0
    %312 = vmatpush.msra.mxu0 0.0
    %313 = vmatpush.msra.mxu0 0.0
    %314 = vmatpush.msra.mxu0 0.0
    %315 = vmatpush.msra.mxu0 0.0
    %316 = vmatpush.msra.mxu0 0.0
    %317 = vmatpush.msra.mxu0 0.0
    %318 = vmatpush.msra.mxu0 0.0
    %319 = vmatpush.msra.mxu0 0.0
    %320 = vmatpush.msra.mxu0 0.0
    %321 = vmatpush.msra.mxu0 0.0
    %322 = vmatpush.msra.mxu0 %v299
    %323 = vmatpush.msra.mxu0 %v297
    %324 = vmatmul.f32.gmra.mxu0 %v303
    %v325 = vpop.f32.mrf.mxu0
    %v326 = vadd.f32 0.0, %v325
    %327 = vmatmul.f32.gmra.mxu0 %v306
    %v328 = vpop.f32.mrf.mxu0
    %v329 = vadd.f32 0.0, %v328
    %330 = vdwg.mxu0
    %331 = vrot.lane.b32.xlu0 %v83, 112
    %v332 = vpop.permute.xlu0 %331
    %333 = vrot.lane.b32.xlu0 %v84, 112
    %v334 = vpop.permute.xlu0 %333
    %335 = vrot.lane.b32.xlu0 %v78, 80
    %v336 = vpop.permute.xlu0 %335
    %337 = vrot.lane.b32.xlu0 %v81, 80
    %v338 = vpop.permute.xlu0 %337
    %v339 = vsel %vm91, %v332, 0
    %v341 = vsel %vm91, %v334, 0
    %v343 = vsel %vm91, %v336, 0
    %v345 = vsel %vm91, %v338, 0
    %347 = vmatpush.xpose.msra.mxu0 0.0
    %348 = vmatpush.xpose.msra.mxu0 0.0
    %349 = vmatpush.xpose.msra.mxu0 0.0
    %350 = vmatpush.xpose.msra.mxu0 0.0
    %351 = vmatpush.xpose.msra.mxu0 0.0
    %352 = vmatpush.xpose.msra.mxu0 0.0
    %353 = vmatpush.xpose.msra.mxu0 0.0
    %354 = vmatpush.xpose.msra.mxu0 0.0
    %355 = vmatpush.xpose.msra.mxu0 0.0
    %356 = vmatpush.xpose.msra.mxu0 0.0
    %357 = vmatpush.xpose.msra.mxu0 0.0
    %358 = vmatpush.xpose.msra.mxu0 0.0
    %359 = vmatpush.xpose.msra.mxu0 0.0
    %360 = vmatpush.xpose.msra.mxu0 0.0
    %361 = vmatpush.xpose.msra.mxu0 %v345
    %362 = vmatpush.xpose.msra.mxu0 %v343
    %363 = vmatmul.f32.gmra.mxu0 %v339
    %v364 = vpop.f32.mrf.mxu0
    %v365 = vadd.f32 0.0, %v364
    %366 = vmatmul.f32.gmra.mxu0 %v341
    %v367 = vpop.f32.mrf.mxu0
    %v368 = vadd.f32 0.0, %v367
    %369 = vdwg.mxu0
    %v370 = vsel %vm125, %v365, -inf
    %371 = vmax.xlane.f32.xlu0 %v370
    %v372 = vpop.xlane.xlu0 %371
    %v373 = vsel %vm125, %v368, -inf
    %374 = vmax.xlane.f32.xlu0 %v373
    %v375 = vpop.xlane.xlu0 %374
    %v376 = vsub.f32 %v365, %v372
    %v377 = vsub.f32 %v368, %v375
    %v378 = vmul.f32 %v376, 1.442695
    %v379 = vpow.pop %v378
    %v380 = vmul.f32 %v377, 1.442695
    %v381 = vpow.pop %v380
    %v382 = vsel %vm125, %v379, 0.0
    %383 = vadd.xlane.f32.xlu0 %v382
    %v384 = vpop.xlane.xlu0 %383
    %v385 = vsel %vm125, %v381, 0.0
    %386 = vadd.xlane.f32.xlu0 %v385
    %v387 = vpop.xlane.xlu0 %386
    %v388 = vrcp.pop %v384
    %v389 = vmul.f32 %v384, %v388
    %v390 = vsub.f32 1.0, %v389
    %v391 = vmul.f32 %v388, %v390
    %v392 = vadd.f32 %v388, %v391
    %vm393 = vweird.f32 %v384
    %vm394 = vweird.f32 %v388
    %vm395 = vmor %vm393, %vm394
    %v396 = vsel %vm395, %v388, %v392
    %v397 = vand.u32 2147483647, %v384
    %vm398 = vcmp.eq.f32.partialorder %v397, 8.507059e+37
    %v399 = vand.u32 %v384, 2147483648
    %v400 = vor.u32 1.1754944e-38, %v399
    %v401 = vsel %vm398, %v400, %v396
    %v402 = vmul.f32 %v379, %v401
    %v403 = vrcp.pop %v387
    %v404 = vmul.f32 %v387, %v403
    %v405 = vsub.f32 1.0, %v404
    %v406 = vmul.f32 %v403, %v405
    %v407 = vadd.f32 %v403, %v406
    %vm408 = vweird.f32 %v387
    %vm409 = vweird.f32 %v403
    %vm410 = vmor %vm408, %vm409
    %v411 = vsel %vm410, %v403, %v407
    %v412 = vand.u32 2147483647, %v387
    %vm413 = vcmp.eq.f32.partialorder %v412, 8.507059e+37
    %v414 = vand.u32 %v387, 2147483648
    %v415 = vor.u32 1.1754944e-38, %v414
    %v416 = vsel %vm413, %v415, %v411
    %v417 = vmul.f32 %v381, %v416
    %418 = vrot.lane.b32.xlu0 %v78, 48
    %v419 = vpop.permute.xlu0 %418
    %420 = vrot.lane.b32.xlu0 %v81, 48
    %v421 = vpop.permute.xlu0 %420
    %v425 = vsel %vm125, %v402, 0
    %v428 = vsel %vm125, %v417, 0
    %430 = vmatpush.msra.mxu0 0.0
    %431 = vmatpush.msra.mxu0 0.0
    %432 = vmatpush.msra.mxu0 0.0
    %433 = vmatpush.msra.mxu0 0.0
    %434 = vmatpush.msra.mxu0 0.0
    %435 = vmatpush.msra.mxu0 0.0
    %436 = vmatpush.msra.mxu0 0.0
    %437 = vmatpush.msra.mxu0 0.0
    %438 = vmatpush.msra.mxu0 0.0
    %439 = vmatpush.msra.mxu0 0.0
    %440 = vmatpush.msra.mxu0 0.0
    %441 = vmatpush.msra.mxu0 0.0
    %442 = vmatpush.msra.mxu0 0.0
    %443 = vmatpush.msra.mxu0 0.0
    %444 = vmatpush.msra.mxu0 %v421
    %445 = vmatpush.msra.mxu0 %v419
    %446 = vmatmul.f32.gmra.mxu0 %v425
    %v447 = vpop.f32.mrf.mxu0
    %v448 = vadd.f32 0.0, %v447
    %449 = vmatmul.f32.gmra.mxu0 %v428
    %v450 = vpop.f32.mrf.mxu0
    %v451 = vadd.f32 0.0, %v450
    %452 = vdwg.mxu0
    %453 = vrot.lane.b32.xlu0 %v83, 104
    %v454 = vpop.permute.xlu0 %453
    %455 = vrot.lane.b32.xlu0 %v84, 104
    %v456 = vpop.permute.xlu0 %455
    %457 = vrot.lane.b32.xlu0 %v78, 72
    %v458 = vpop.permute.xlu0 %457
    %459 = vrot.lane.b32.xlu0 %v81, 72
    %v460 = vpop.permute.xlu0 %459
    %v461 = vsel %vm91, %v454, 0
    %v463 = vsel %vm91, %v456, 0
    %v465 = vsel %vm91, %v458, 0
    %v467 = vsel %vm91, %v460, 0
    %469 = vmatpush.xpose.msra.mxu0 0.0
    %470 = vmatpush.xpose.msra.mxu0 0.0
    %471 = vmatpush.xpose.msra.mxu0 0.0
    %472 = vmatpush.xpose.msra.mxu0 0.0
    %473 = vmatpush.xpose.msra.mxu0 0.0
    %474 = vmatpush.xpose.msra.mxu0 0.0
    %475 = vmatpush.xpose.msra.mxu0 0.0
    %476 = vmatpush.xpose.msra.mxu0 0.0
    %477 = vmatpush.xpose.msra.mxu0 0.0
    %478 = vmatpush.xpose.msra.mxu0 0.0
    %479 = vmatpush.xpose.msra.mxu0 0.0
    %480 = vmatpush.xpose.msra.mxu0 0.0
    %481 = vmatpush.xpose.msra.mxu0 0.0
    %482 = vmatpush.xpose.msra.mxu0 0.0
    %483 = vmatpush.xpose.msra.mxu0 %v467
    %484 = vmatpush.xpose.msra.mxu0 %v465
    %485 = vmatmul.f32.gmra.mxu0 %v461
    %v486 = vpop.f32.mrf.mxu0
    %v487 = vadd.f32 0.0, %v486
    %488 = vmatmul.f32.gmra.mxu0 %v463
    %v489 = vpop.f32.mrf.mxu0
    %v490 = vadd.f32 0.0, %v489
    %491 = vdwg.mxu0
    %v492 = vsel %vm125, %v487, -inf
    %493 = vmax.xlane.f32.xlu0 %v492
    %v494 = vpop.xlane.xlu0 %493
    %v495 = vsel %vm125, %v490, -inf
    %496 = vmax.xlane.f32.xlu0 %v495
    %v497 = vpop.xlane.xlu0 %496
    %v498 = vsub.f32 %v487, %v494
    %v499 = vsub.f32 %v490, %v497
    %v500 = vmul.f32 %v498, 1.442695
    %v501 = vpow.pop %v500
    %v502 = vmul.f32 %v499, 1.442695
    %v503 = vpow.pop %v502
    %v504 = vsel %vm125, %v501, 0.0
    %505 = vadd.xlane.f32.xlu0 %v504
    %v506 = vpop.xlane.xlu0 %505
    %v507 = vsel %vm125, %v503, 0.0
    %508 = vadd.xlane.f32.xlu0 %v507
    %v509 = vpop.xlane.xlu0 %508
    %v510 = vrcp.pop %v506
    %v511 = vmul.f32 %v506, %v510
    %v512 = vsub.f32 1.0, %v511
    %v513 = vmul.f32 %v510, %v512
    %v514 = vadd.f32 %v510, %v513
    %vm515 = vweird.f32 %v506
    %vm516 = vweird.f32 %v510
    %vm517 = vmor %vm515, %vm516
    %v518 = vsel %vm517, %v510, %v514
    %v519 = vand.u32 2147483647, %v506
    %vm520 = vcmp.eq.f32.partialorder %v519, 8.507059e+37
    %v521 = vand.u32 %v506, 2147483648
    %v522 = vor.u32 1.1754944e-38, %v521
    %v523 = vsel %vm520, %v522, %v518
    %v524 = vmul.f32 %v501, %v523
    %v525 = vrcp.pop %v509
    %v526 = vmul.f32 %v509, %v525
    %v527 = vsub.f32 1.0, %v526
    %v528 = vmul.f32 %v525, %v527
    %v529 = vadd.f32 %v525, %v528
    %vm530 = vweird.f32 %v509
    %vm531 = vweird.f32 %v525
    %vm532 = vmor %vm530, %vm531
    %v533 = vsel %vm532, %v525, %v529
    %v534 = vand.u32 2147483647, %v509
    %vm535 = vcmp.eq.f32.partialorder %v534, 8.507059e+37
    %v536 = vand.u32 %v509, 2147483648
    %v537 = vor.u32 1.1754944e-38, %v536
    %v538 = vsel %vm535, %v537, %v533
    %v539 = vmul.f32 %v503, %v538
    %540 = vrot.lane.b32.xlu0 %v78, 40
    %v541 = vpop.permute.xlu0 %540
    %542 = vrot.lane.b32.xlu0 %v81, 40
    %v543 = vpop.permute.xlu0 %542
    %v547 = vsel %vm125, %v524, 0
    %v550 = vsel %vm125, %v539, 0
    %552 = vmatpush.msra.mxu0 0.0
    %553 = vmatpush.msra.mxu0 0.0
    %554 = vmatpush.msra.mxu0 0.0
    %555 = vmatpush.msra.mxu0 0.0
    %556 = vmatpush.msra.mxu0 0.0
    %557 = vmatpush.msra.mxu0 0.0
    %558 = vmatpush.msra.mxu0 0.0
    %559 = vmatpush.msra.mxu0 0.0
    %560 = vmatpush.msra.mxu0 0.0
    %561 = vmatpush.msra.mxu0 0.0
    %562 = vmatpush.msra.mxu0 0.0
    %563 = vmatpush.msra.mxu0 0.0
    %564 = vmatpush.msra.mxu0 0.0
    %565 = vmatpush.msra.mxu0 0.0
    %566 = vmatpush.msra.mxu0 %v543
    %567 = vmatpush.msra.mxu0 %v541
    %568 = vmatmul.f32.gmra.mxu0 %v547
    %v569 = vpop.f32.mrf.mxu0
    %v570 = vadd.f32 0.0, %v569
    %571 = vmatmul.f32.gmra.mxu0 %v550
    %v572 = vpop.f32.mrf.mxu0
    %v573 = vadd.f32 0.0, %v572
    %574 = vdwg.mxu0
    %577 = vrot.lane.b32.xlu0 %v326, 8
    %v578 = vpop.permute.xlu0 %577
    %579 = vrot.lane.b32.xlu0 %v329, 8
    %v580 = vpop.permute.xlu0 %579
    %585 = vrot.lane.b32.xlu0 %v448, 16
    %v586 = vpop.permute.xlu0 %585
    %587 = vrot.lane.b32.xlu0 %v451, 16
    %v588 = vpop.permute.xlu0 %587
    %593 = vrot.lane.b32.xlu0 %v570, 24
    %v594 = vpop.permute.xlu0 %593
    %595 = vrot.lane.b32.xlu0 %v573, 24
    %v596 = vpop.permute.xlu0 %595
    %v599 = vsel %vm91, %v204, %v578
    %v600 = vsel %vm91, %v207, %v580
    %v601 = vsel %vm125, %v599, %v586
    %v602 = vsel %vm125, %v600, %v588
    %vm603 = vcmask 195584
    %v604 = vsel %vm603, %v601, %v594
    %v605 = vsel %vm603, %v602, %v596
    %v607 = vperm.slane %v42, 0
    %v610 = vsel %vm53, %v604, 0
    %v613 = vsel %vm53, %v605, 0
    %615 = vmatpush.msra.mxu0 0.0
    %616 = vmatpush.msra.mxu0 0.0
    %617 = vmatpush.msra.mxu0 0.0
    %618 = vmatpush.msra.mxu0 0.0
    %619 = vmatpush.msra.mxu0 0.0
    %620 = vmatpush.msra.mxu0 0.0
    %621 = vmatpush.msra.mxu0 0.0
    %622 = vmatpush.msra.mxu0 0.0
    %623 = vmatpush.msra.mxu0 0.0
    %624 = vmatpush.msra.mxu0 0.0
    %625 = vmatpush.msra.mxu0 0.0
    %626 = vmatpush.msra.mxu0 0.0
    %627 = vmatpush.msra.mxu0 %v41
    %628 = vmatpush.msra.mxu0 %v40
    %629 = vmatpush.msra.mxu0 %v39
    %630 = vmatpush.msra.mxu0 %v38
    %631 = vmatmul.f32.gmra.mxu0 %v610
    %v632 = vpop.f32.mrf.mxu0
    %v633 = vadd.f32 %v607, %v632
    %634 = vmatmul.f32.gmra.mxu0 %v613
    %v635 = vpop.f32.mrf.mxu0
    %v636 = vadd.f32 %v607, %v635
    %637 = vdwg.mxu0
    %v639 = vperm.slane %v47, 0
    %v642 = vsel %vm53, %v633, 0
    %v645 = vsel %vm53, %v636, 0
    %647 = vmatpush.msra.mxu0 0.0
    %648 = vmatpush.msra.mxu0 0.0
    %649 = vmatpush.msra.mxu0 0.0
    %650 = vmatpush.msra.mxu0 0.0
    %651 = vmatpush.msra.mxu0 0.0
    %652 = vmatpush.msra.mxu0 0.0
    %653 = vmatpush.msra.mxu0 0.0
    %654 = vmatpush.msra.mxu0 0.0
    %655 = vmatpush.msra.mxu0 0.0
    %656 = vmatpush.msra.mxu0 0.0
    %657 = vmatpush.msra.mxu0 0.0
    %658 = vmatpush.msra.mxu0 0.0
    %659 = vmatpush.msra.mxu0 %v46
    %660 = vmatpush.msra.mxu0 %v45
    %661 = vmatpush.msra.mxu0 %v44
    %662 = vmatpush.msra.mxu0 %v43
    %663 = vmatmul.f32.gmra.mxu0 %v642
    %v664 = vpop.f32.mrf.mxu0
    %v665 = vadd.f32 %v639, %v664
    %666 = vmatmul.f32.gmra.mxu0 %v645
    %v667 = vpop.f32.mrf.mxu0
    %v668 = vadd.f32 %v639, %v667
    %669 = vdwg.mxu0
    %s670 = scalar_lea.vmem %s0, 16
    %v671 = vld [vmem:[%s670] sm:$0xff]
    %v672 = vld [vmem:[%s670 + $0x8] sm:$0xff]
    %v674 = vsel %vm53, %v671, 0
    %v677 = vsel %vm53, %v672, 0
    %679 = vmatpush.msra.mxu0 0.0
    %680 = vmatpush.msra.mxu0 0.0
    %681 = vmatpush.msra.mxu0 0.0
    %682 = vmatpush.msra.mxu0 0.0
    %683 = vmatpush.msra.mxu0 0.0
    %684 = vmatpush.msra.mxu0 0.0
    %685 = vmatpush.msra.mxu0 0.0
    %686 = vmatpush.msra.mxu0 0.0
    %687 = vmatpush.msra.mxu0 0.0
    %688 = vmatpush.msra.mxu0 0.0
    %689 = vmatpush.msra.mxu0 0.0
    %690 = vmatpush.msra.mxu0 0.0
    %691 = vmatpush.msra.mxu0 %v36
    %692 = vmatpush.msra.mxu0 %v35
    %693 = vmatpush.msra.mxu0 %v34
    %694 = vmatpush.msra.mxu0 %v33
    %695 = vmatmul.f32.gmra.mxu0 %v674
    %v696 = vpop.f32.mrf.mxu0
    %v697 = vadd.f32 %v51, %v696
    %698 = vmatmul.f32.gmra.mxu0 %v677
    %v699 = vpop.f32.mrf.mxu0
    %v700 = vadd.f32 %v51, %v699
    %701 = vdwg.mxu0
    %v702 = vmul.f32 %v697, 0.35355338
    %v703 = vmul.f32 %v700, 0.35355338
    %706 = vrot.lane.b32.xlu0 %v697, 96
    %v707 = vpop.permute.xlu0 %706
    %708 = vrot.lane.b32.xlu0 %v700, 96
    %v709 = vpop.permute.xlu0 %708
    %v711 = vsel %vm91, %v702, 0
    %v714 = vsel %vm91, %v703, 0
    %v716 = vsel %vm91, %v707, 0
    %v718 = vsel %vm91, %v709, 0
    %720 = vmatpush.xpose.msra.mxu0 0.0
    %721 = vmatpush.xpose.msra.mxu0 0.0
    %722 = vmatpush.xpose.msra.mxu0 0.0
    %723 = vmatpush.xpose.msra.mxu0 0.0
    %724 = vmatpush.xpose.msra.mxu0 0.0
    %725 = vmatpush.xpose.msra.mxu0 0.0
    %726 = vmatpush.xpose.msra.mxu0 0.0
    %727 = vmatpush.xpose.msra.mxu0 0.0
    %728 = vmatpush.xpose.msra.mxu0 0.0
    %729 = vmatpush.xpose.msra.mxu0 0.0
    %730 = vmatpush.xpose.msra.mxu0 0.0
    %731 = vmatpush.xpose.msra.mxu0 0.0
    %732 = vmatpush.xpose.msra.mxu0 0.0
    %733 = vmatpush.xpose.msra.mxu0 0.0
    %734 = vmatpush.xpose.msra.mxu0 %v718
    %735 = vmatpush.xpose.msra.mxu0 %v716
    %736 = vmatmul.f32.gmra.mxu0 %v711
    %v737 = vpop.f32.mrf.mxu0
    %v738 = vadd.f32 0.0, %v737
    %739 = vmatmul.f32.gmra.mxu0 %v714
    %v740 = vpop.f32.mrf.mxu0
    %v741 = vadd.f32 0.0, %v740
    %742 = vdwg.mxu0
    %v743 = vsel %vm125, %v738, -inf
    %744 = vmax.xlane.f32.xlu0 %v743
    %v745 = vpop.xlane.xlu0 %744
    %v746 = vsel %vm125, %v741, -inf
    %747 = vmax.xlane.f32.xlu0 %v746
    %v748 = vpop.xlane.xlu0 %747
    %v749 = vsub.f32 %v738, %v745
    %v750 = vsub.f32 %v741, %v748
    %v751 = vmul.f32 %v749, 1.442695
    %v752 = vpow.pop %v751
    %v753 = vmul.f32 %v750, 1.442695
    %v754 = vpow.pop %v753
    %v755 = vsel %vm125, %v752, 0.0
    %756 = vadd.xlane.f32.xlu0 %v755
    %v757 = vpop.xlane.xlu0 %756
    %v758 = vsel %vm125, %v754, 0.0
    %759 = vadd.xlane.f32.xlu0 %v758
    %v760 = vpop.xlane.xlu0 %759
    %v761 = vrcp.pop %v757
    %v762 = vmul.f32 %v757, %v761
    %v763 = vsub.f32 1.0, %v762
    %v764 = vmul.f32 %v761, %v763
    %v765 = vadd.f32 %v761, %v764
    %vm766 = vweird.f32 %v757
    %vm767 = vweird.f32 %v761
    %vm768 = vmor %vm766, %vm767
    %v769 = vsel %vm768, %v761, %v765
    %v770 = vand.u32 2147483647, %v757
    %vm771 = vcmp.eq.f32.partialorder %v770, 8.507059e+37
    %v772 = vand.u32 %v757, 2147483648
    %v773 = vor.u32 1.1754944e-38, %v772
    %v774 = vsel %vm771, %v773, %v769
    %v775 = vmul.f32 %v752, %v774
    %v776 = vrcp.pop %v760
    %v777 = vmul.f32 %v760, %v776
    %v778 = vsub.f32 1.0, %v777
    %v779 = vmul.f32 %v776, %v778
    %v780 = vadd.f32 %v776, %v779
    %vm781 = vweird.f32 %v760
    %vm782 = vweird.f32 %v776
    %vm783 = vmor %vm781, %vm782
    %v784 = vsel %vm783, %v776, %v780
    %v785 = vand.u32 2147483647, %v760
    %vm786 = vcmp.eq.f32.partialorder %v785, 8.507059e+37
    %v787 = vand.u32 %v760, 2147483648
    %v788 = vor.u32 1.1754944e-38, %v787
    %v789 = vsel %vm786, %v788, %v784
    %v790 = vmul.f32 %v754, %v789
    %791 = vrot.lane.b32.xlu0 %v697, 64
    %v792 = vpop.permute.xlu0 %791
    %793 = vrot.lane.b32.xlu0 %v700, 64
    %v794 = vpop.permute.xlu0 %793
    %v798 = vsel %vm125, %v775, 0
    %v801 = vsel %vm125, %v790, 0
    %803 = vmatpush.msra.mxu0 0.0
    %804 = vmatpush.msra.mxu0 0.0
    %805 = vmatpush.msra.mxu0 0.0
    %806 = vmatpush.msra.mxu0 0.0
    %807 = vmatpush.msra.mxu0 0.0
    %808 = vmatpush.msra.mxu0 0.0
    %809 = vmatpush.msra.mxu0 0.0
    %810 = vmatpush.msra.mxu0 0.0
    %811 = vmatpush.msra.mxu0 0.0
    %812 = vmatpush.msra.mxu0 0.0
    %813 = vmatpush.msra.mxu0 0.0
    %814 = vmatpush.msra.mxu0 0.0
    %815 = vmatpush.msra.mxu0 0.0
    %816 = vmatpush.msra.mxu0 0.0
    %817 = vmatpush.msra.mxu0 %v794
    %818 = vmatpush.msra.mxu0 %v792
    %819 = vmatmul.f32.gmra.mxu0 %v798
    %v820 = vpop.f32.mrf.mxu0
    %v821 = vadd.f32 0.0, %v820
    %822 = vmatmul.f32.gmra.mxu0 %v801
    %v823 = vpop.f32.mrf.mxu0
    %v824 = vadd.f32 0.0, %v823
    %825 = vdwg.mxu0
    %826 = vrot.lane.b32.xlu0 %v702, 120
    %v827 = vpop.permute.xlu0 %826
    %828 = vrot.lane.b32.xlu0 %v703, 120
    %v829 = vpop.permute.xlu0 %828
    %830 = vrot.lane.b32.xlu0 %v697, 88
    %v831 = vpop.permute.xlu0 %830
    %832 = vrot.lane.b32.xlu0 %v700, 88
    %v833 = vpop.permute.xlu0 %832
    %v834 = vsel %vm91, %v827, 0
    %v836 = vsel %vm91, %v829, 0
    %v838 = vsel %vm91, %v831, 0
    %v840 = vsel %vm91, %v833, 0
    %842 = vmatpush.xpose.msra.mxu0 0.0
    %843 = vmatpush.xpose.msra.mxu0 0.0
    %844 = vmatpush.xpose.msra.mxu0 0.0
    %845 = vmatpush.xpose.msra.mxu0 0.0
    %846 = vmatpush.xpose.msra.mxu0 0.0
    %847 = vmatpush.xpose.msra.mxu0 0.0
    %848 = vmatpush.xpose.msra.mxu0 0.0
    %849 = vmatpush.xpose.msra.mxu0 0.0
    %850 = vmatpush.xpose.msra.mxu0 0.0
    %851 = vmatpush.xpose.msra.mxu0 0.0
    %852 = vmatpush.xpose.msra.mxu0 0.0
    %853 = vmatpush.xpose.msra.mxu0 0.0
    %854 = vmatpush.xpose.msra.mxu0 0.0
    %855 = vmatpush.xpose.msra.mxu0 0.0
    %856 = vmatpush.xpose.msra.mxu0 %v840
    %857 = vmatpush.xpose.msra.mxu0 %v838
    %858 = vmatmul.f32.gmra.mxu0 %v834
    %v859 = vpop.f32.mrf.mxu0
    %v860 = vadd.f32 0.0, %v859
    %861 = vmatmul.f32.gmra.mxu0 %v836
    %v862 = vpop.f32.mrf.mxu0
    %v863 = vadd.f32 0.0, %v862
    %864 = vdwg.mxu0
    %v865 = vsel %vm125, %v860, -inf
    %866 = vmax.xlane.f32.xlu0 %v865
    %v867 = vpop.xlane.xlu0 %866
    %v868 = vsel %vm125, %v863, -inf
    %869 = vmax.xlane.f32.xlu0 %v868
    %v870 = vpop.xlane.xlu0 %869
    %v871 = vsub.f32 %v860, %v867
    %v872 = vsub.f32 %v863, %v870
    %v873 = vmul.f32 %v871, 1.442695
    %v874 = vpow.pop %v873
    %v875 = vmul.f32 %v872, 1.442695
    %v876 = vpow.pop %v875
    %v877 = vsel %vm125, %v874, 0.0
    %878 = vadd.xlane.f32.xlu0 %v877
    %v879 = vpop.xlane.xlu0 %878
    %v880 = vsel %vm125, %v876, 0.0
    %881 = vadd.xlane.f32.xlu0 %v880
    %v882 = vpop.xlane.xlu0 %881
    %v883 = vrcp.pop %v879
    %v884 = vmul.f32 %v879, %v883
    %v885 = vsub.f32 1.0, %v884
    %v886 = vmul.f32 %v883, %v885
    %v887 = vadd.f32 %v883, %v886
    %vm888 = vweird.f32 %v879
    %vm889 = vweird.f32 %v883
    %vm890 = vmor %vm888, %vm889
    %v891 = vsel %vm890, %v883, %v887
    %v892 = vand.u32 2147483647, %v879
    %vm893 = vcmp.eq.f32.partialorder %v892, 8.507059e+37
    %v894 = vand.u32 %v879, 2147483648
    %v895 = vor.u32 1.1754944e-38, %v894
    %v896 = vsel %vm893, %v895, %v891
    %v897 = vmul.f32 %v874, %v896
    %v898 = vrcp.pop %v882
    %v899 = vmul.f32 %v882, %v898
    %v900 = vsub.f32 1.0, %v899
    %v901 = vmul.f32 %v898, %v900
    %v902 = vadd.f32 %v898, %v901
    %vm903 = vweird.f32 %v882
    %vm904 = vweird.f32 %v898
    %vm905 = vmor %vm903, %vm904
    %v906 = vsel %vm905, %v898, %v902
    %v907 = vand.u32 2147483647, %v882
    %vm908 = vcmp.eq.f32.partialorder %v907, 8.507059e+37
    %v909 = vand.u32 %v882, 2147483648
    %v910 = vor.u32 1.1754944e-38, %v909
    %v911 = vsel %vm908, %v910, %v906
    %v912 = vmul.f32 %v876, %v911
    %913 = vrot.lane.b32.xlu0 %v697, 56
    %v914 = vpop.permute.xlu0 %913
    %915 = vrot.lane.b32.xlu0 %v700, 56
    %v916 = vpop.permute.xlu0 %915
    %v920 = vsel %vm125, %v897, 0
    %v923 = vsel %vm125, %v912, 0
    %925 = vmatpush.msra.mxu0 0.0
    %926 = vmatpush.msra.mxu0 0.0
    %927 = vmatpush.msra.mxu0 0.0
    %928 = vmatpush.msra.mxu0 0.0
    %929 = vmatpush.msra.mxu0 0.0
    %930 = vmatpush.msra.mxu0 0.0
    %931 = vmatpush.msra.mxu0 0.0
    %932 = vmatpush.msra.mxu0 0.0
    %933 = vmatpush.msra.mxu0 0.0
    %934 = vmatpush.msra.mxu0 0.0
    %935 = vmatpush.msra.mxu0 0.0
    %936 = vmatpush.msra.mxu0 0.0
    %937 = vmatpush.msra.mxu0 0.0
    %938 = vmatpush.msra.mxu0 0.0
    %939 = vmatpush.msra.mxu0 %v916
    %940 = vmatpush.msra.mxu0 %v914
    %941 = vmatmul.f32.gmra.mxu0 %v920
    %v942 = vpop.f32.mrf.mxu0
    %v943 = vadd.f32 0.0, %v942
    %944 = vmatmul.f32.gmra.mxu0 %v923
    %v945 = vpop.f32.mrf.mxu0
    %v946 = vadd.f32 0.0, %v945
    %947 = vdwg.mxu0
    %948 = vrot.lane.b32.xlu0 %v702, 112
    %v949 = vpop.permute.xlu0 %948
    %950 = vrot.lane.b32.xlu0 %v703, 112
    %v951 = vpop.permute.xlu0 %950
    %952 = vrot.lane.b32.xlu0 %v697, 80
    %v953 = vpop.permute.xlu0 %952
    %954 = vrot.lane.b32.xlu0 %v700, 80
    %v955 = vpop.permute.xlu0 %954
    %v956 = vsel %vm91, %v949, 0
    %v958 = vsel %vm91, %v951, 0
    %v960 = vsel %vm91, %v953, 0
    %v962 = vsel %vm91, %v955, 0
    %964 = vmatpush.xpose.msra.mxu0 0.0
    %965 = vmatpush.xpose.msra.mxu0 0.0
    %966 = vmatpush.xpose.msra.mxu0 0.0
    %967 = vmatpush.xpose.msra.mxu0 0.0
    %968 = vmatpush.xpose.msra.mxu0 0.0
    %969 = vmatpush.xpose.msra.mxu0 0.0
    %970 = vmatpush.xpose.msra.mxu0 0.0
    %971 = vmatpush.xpose.msra.mxu0 0.0
    %972 = vmatpush.xpose.msra.mxu0 0.0
    %973 = vmatpush.xpose.msra.mxu0 0.0
    %974 = vmatpush.xpose.msra.mxu0 0.0
    %975 = vmatpush.xpose.msra.mxu0 0.0
    %976 = vmatpush.xpose.msra.mxu0 0.0
    %977 = vmatpush.xpose.msra.mxu0 0.0
    %978 = vmatpush.xpose.msra.mxu0 %v962
    %979 = vmatpush.xpose.msra.mxu0 %v960
    %980 = vmatmul.f32.gmra.mxu0 %v956
    %v981 = vpop.f32.mrf.mxu0
    %v982 = vadd.f32 0.0, %v981
    %983 = vmatmul.f32.gmra.mxu0 %v958
    %v984 = vpop.f32.mrf.mxu0
    %v985 = vadd.f32 0.0, %v984
    %986 = vdwg.mxu0
    %v987 = vsel %vm125, %v982, -inf
    %988 = vmax.xlane.f32.xlu0 %v987
    %v989 = vpop.xlane.xlu0 %988
    %v990 = vsel %vm125, %v985, -inf
    %991 = vmax.xlane.f32.xlu0 %v990
    %v992 = vpop.xlane.xlu0 %991
    %v993 = vsub.f32 %v982, %v989
    %v994 = vsub.f32 %v985, %v992
    %v995 = vmul.f32 %v993, 1.442695
    %v996 = vpow.pop %v995
    %v997 = vmul.f32 %v994, 1.442695
    %v998 = vpow.pop %v997
    %v999 = vsel %vm125, %v996, 0.0
    %1000 = vadd.xlane.f32.xlu0 %v999
    %v1001 = vpop.xlane.xlu0 %1000
    %v1002 = vsel %vm125, %v998, 0.0
    %1003 = vadd.xlane.f32.xlu0 %v1002
    %v1004 = vpop.xlane.xlu0 %1003
    %v1005 = vrcp.pop %v1001
    %v1006 = vmul.f32 %v1001, %v1005
    %v1007 = vsub.f32 1.0, %v1006
    %v1008 = vmul.f32 %v1005, %v1007
    %v1009 = vadd.f32 %v1005, %v1008
    %vm1010 = vweird.f32 %v1001
    %vm1011 = vweird.f32 %v1005
    %vm1012 = vmor %vm1010, %vm1011
    %v1013 = vsel %vm1012, %v1005, %v1009
    %v1014 = vand.u32 2147483647, %v1001
    %vm1015 = vcmp.eq.f32.partialorder %v1014, 8.507059e+37
    %v1016 = vand.u32 %v1001, 2147483648
    %v1017 = vor.u32 1.1754944e-38, %v1016
    %v1018 = vsel %vm1015, %v1017, %v1013
    %v1019 = vmul.f32 %v996, %v1018
    %v1020 = vrcp.pop %v1004
    %v1021 = vmul.f32 %v1004, %v1020
    %v1022 = vsub.f32 1.0, %v1021
    %v1023 = vmul.f32 %v1020, %v1022
    %v1024 = vadd.f32 %v1020, %v1023
    %vm1025 = vweird.f32 %v1004
    %vm1026 = vweird.f32 %v1020
    %vm1027 = vmor %vm1025, %vm1026
    %v1028 = vsel %vm1027, %v1020, %v1024
    %v1029 = vand.u32 2147483647, %v1004
    %vm1030 = vcmp.eq.f32.partialorder %v1029, 8.507059e+37
    %v1031 = vand.u32 %v1004, 2147483648
    %v1032 = vor.u32 1.1754944e-38, %v1031
    %v1033 = vsel %vm1030, %v1032, %v1028
    %v1034 = vmul.f32 %v998, %v1033
    %1035 = vrot.lane.b32.xlu0 %v697, 48
    %v1036 = vpop.permute.xlu0 %1035
    %1037 = vrot.lane.b32.xlu0 %v700, 48
    %v1038 = vpop.permute.xlu0 %1037
    %v1042 = vsel %vm125, %v1019, 0
    %v1045 = vsel %vm125, %v1034, 0
    %1047 = vmatpush.msra.mxu0 0.0
    %1048 = vmatpush.msra.mxu0 0.0
    %1049 = vmatpush.msra.mxu0 0.0
    %1050 = vmatpush.msra.mxu0 0.0
    %1051 = vmatpush.msra.mxu0 0.0
    %1052 = vmatpush.msra.mxu0 0.0
    %1053 = vmatpush.msra.mxu0 0.0
    %1054 = vmatpush.msra.mxu0 0.0
    %1055 = vmatpush.msra.mxu0 0.0
    %1056 = vmatpush.msra.mxu0 0.0
    %1057 = vmatpush.msra.mxu0 0.0
    %1058 = vmatpush.msra.mxu0 0.0
    %1059 = vmatpush.msra.mxu0 0.0
    %1060 = vmatpush.msra.mxu0 0.0
    %1061 = vmatpush.msra.mxu0 %v1038
    %1062 = vmatpush.msra.mxu0 %v1036
    %1063 = vmatmul.f32.gmra.mxu0 %v1042
    %v1064 = vpop.f32.mrf.mxu0
    %v1065 = vadd.f32 0.0, %v1064
    %1066 = vmatmul.f32.gmra.mxu0 %v1045
    %v1067 = vpop.f32.mrf.mxu0
    %v1068 = vadd.f32 0.0, %v1067
    %1069 = vdwg.mxu0
    %1070 = vrot.lane.b32.xlu0 %v702, 104
    %v1071 = vpop.permute.xlu0 %1070
    %1072 = vrot.lane.b32.xlu0 %v703, 104
    %v1073 = vpop.permute.xlu0 %1072
    %1074 = vrot.lane.b32.xlu0 %v697, 72
    %v1075 = vpop.permute.xlu0 %1074
    %1076 = vrot.lane.b32.xlu0 %v700, 72
    %v1077 = vpop.permute.xlu0 %1076
    %v1078 = vsel %vm91, %v1071, 0
    %v1080 = vsel %vm91, %v1073, 0
    %v1082 = vsel %vm91, %v1075, 0
    %v1084 = vsel %vm91, %v1077, 0
    %1086 = vmatpush.xpose.msra.mxu0 0.0
    %1087 = vmatpush.xpose.msra.mxu0 0.0
    %1088 = vmatpush.xpose.msra.mxu0 0.0
    %1089 = vmatpush.xpose.msra.mxu0 0.0
    %1090 = vmatpush.xpose.msra.mxu0 0.0
    %1091 = vmatpush.xpose.msra.mxu0 0.0
    %1092 = vmatpush.xpose.msra.mxu0 0.0
    %1093 = vmatpush.xpose.msra.mxu0 0.0
    %1094 = vmatpush.xpose.msra.mxu0 0.0
    %1095 = vmatpush.xpose.msra.mxu0 0.0
    %1096 = vmatpush.xpose.msra.mxu0 0.0
    %1097 = vmatpush.xpose.msra.mxu0 0.0
    %1098 = vmatpush.xpose.msra.mxu0 0.0
    %1099 = vmatpush.xpose.msra.mxu0 0.0
    %1100 = vmatpush.xpose.msra.mxu0 %v1084
    %1101 = vmatpush.xpose.msra.mxu0 %v1082
    %1102 = vmatmul.f32.gmra.mxu0 %v1078
    %v1103 = vpop.f32.mrf.mxu0
    %v1104 = vadd.f32 0.0, %v1103
    %1105 = vmatmul.f32.gmra.mxu0 %v1080
    %v1106 = vpop.f32.mrf.mxu0
    %v1107 = vadd.f32 0.0, %v1106
    %1108 = vdwg.mxu0
    %v1109 = vsel %vm125, %v1104, -inf
    %1110 = vmax.xlane.f32.xlu0 %v1109
    %v1111 = vpop.xlane.xlu0 %1110
    %v1112 = vsel %vm125, %v1107, -inf
    %1113 = vmax.xlane.f32.xlu0 %v1112
    %v1114 = vpop.xlane.xlu0 %1113
    %v1115 = vsub.f32 %v1104, %v1111
    %v1116 = vsub.f32 %v1107, %v1114
    %v1117 = vmul.f32 %v1115, 1.442695
    %v1118 = vpow.pop %v1117
    %v1119 = vmul.f32 %v1116, 1.442695
    %v1120 = vpow.pop %v1119
    %v1121 = vsel %vm125, %v1118, 0.0
    %1122 = vadd.xlane.f32.xlu0 %v1121
    %v1123 = vpop.xlane.xlu0 %1122
    %v1124 = vsel %vm125, %v1120, 0.0
    %1125 = vadd.xlane.f32.xlu0 %v1124
    %v1126 = vpop.xlane.xlu0 %1125
    %v1127 = vrcp.pop %v1123
    %v1128 = vmul.f32 %v1123, %v1127
    %v1129 = vsub.f32 1.0, %v1128
    %v1130 = vmul.f32 %v1127, %v1129
    %v1131 = vadd.f32 %v1127, %v1130
    %vm1132 = vweird.f32 %v1123
    %vm1133 = vweird.f32 %v1127
    %vm1134 = vmor %vm1132, %vm1133
    %v1135 = vsel %vm1134, %v1127, %v1131
    %v1136 = vand.u32 2147483647, %v1123
    %vm1137 = vcmp.eq.f32.partialorder %v1136, 8.507059e+37
    %v1138 = vand.u32 %v1123, 2147483648
    %v1139 = vor.u32 1.1754944e-38, %v1138
    %v1140 = vsel %vm1137, %v1139, %v1135
    %v1141 = vmul.f32 %v1118, %v1140
    %v1142 = vrcp.pop %v1126
    %v1143 = vmul.f32 %v1126, %v1142
    %v1144 = vsub.f32 1.0, %v1143
    %v1145 = vmul.f32 %v1142, %v1144
    %v1146 = vadd.f32 %v1142, %v1145
    %vm1147 = vweird.f32 %v1126
    %vm1148 = vweird.f32 %v1142
    %vm1149 = vmor %vm1147, %vm1148
    %v1150 = vsel %vm1149, %v1142, %v1146
    %v1151 = vand.u32 2147483647, %v1126
    %vm1152 = vcmp.eq.f32.partialorder %v1151, 8.507059e+37
    %v1153 = vand.u32 %v1126, 2147483648
    %v1154 = vor.u32 1.1754944e-38, %v1153
    %v1155 = vsel %vm1152, %v1154, %v1150
    %v1156 = vmul.f32 %v1120, %v1155
    %1157 = vrot.lane.b32.xlu0 %v697, 40
    %v1158 = vpop.permute.xlu0 %1157
    %1159 = vrot.lane.b32.xlu0 %v700, 40
    %v1160 = vpop.permute.xlu0 %1159
    %v1164 = vsel %vm125, %v1141, 0
    %v1167 = vsel %vm125, %v1156, 0
    %1169 = vmatpush.msra.mxu0 0.0
    %1170 = vmatpush.msra.mxu0 0.0
    %1171 = vmatpush.msra.mxu0 0.0
    %1172 = vmatpush.msra.mxu0 0.0
    %1173 = vmatpush.msra.mxu0 0.0
    %1174 = vmatpush.msra.mxu0 0.0
    %1175 = vmatpush.msra.mxu0 0.0
    %1176 = vmatpush.msra.mxu0 0.0
    %1177 = vmatpush.msra.mxu0 0.0
    %1178 = vmatpush.msra.mxu0 0.0
    %1179 = vmatpush.msra.mxu0 0.0
    %1180 = vmatpush.msra.mxu0 0.0
    %1181 = vmatpush.msra.mxu0 0.0
    %1182 = vmatpush.msra.mxu0 0.0
    %1183 = vmatpush.msra.mxu0 %v1160
    %1184 = vmatpush.msra.mxu0 %v1158
    %1185 = vmatmul.f32.gmra.mxu0 %v1164
    %v1186 = vpop.f32.mrf.mxu0
    %v1187 = vadd.f32 0.0, %v1186
    %1188 = vmatmul.f32.gmra.mxu0 %v1167
    %v1189 = vpop.f32.mrf.mxu0
    %v1190 = vadd.f32 0.0, %v1189
    %1191 = vdwg.mxu0
    %1194 = vrot.lane.b32.xlu0 %v943, 8
    %v1195 = vpop.permute.xlu0 %1194
    %1196 = vrot.lane.b32.xlu0 %v946, 8
    %v1197 = vpop.permute.xlu0 %1196
    %1202 = vrot.lane.b32.xlu0 %v1065, 16
    %v1203 = vpop.permute.xlu0 %1202
    %1204 = vrot.lane.b32.xlu0 %v1068, 16
    %v1205 = vpop.permute.xlu0 %1204
    %1210 = vrot.lane.b32.xlu0 %v1187, 24
    %v1211 = vpop.permute.xlu0 %1210
    %1212 = vrot.lane.b32.xlu0 %v1190, 24
    %v1213 = vpop.permute.xlu0 %1212
    %v1216 = vsel %vm91, %v821, %v1195
    %v1217 = vsel %vm91, %v824, %v1197
    %v1218 = vsel %vm125, %v1216, %v1203
    %v1219 = vsel %vm125, %v1217, %v1205
    %v1220 = vsel %vm603, %v1218, %v1211
    %v1221 = vsel %vm603, %v1219, %v1213
    %v1223 = vsel %vm53, %v1220, 0
    %v1226 = vsel %vm53, %v1221, 0
    %1228 = vmatpush.msra.mxu0 0.0
    %1229 = vmatpush.msra.mxu0 0.0
    %1230 = vmatpush.msra.mxu0 0.0
    %1231 = vmatpush.msra.mxu0 0.0
    %1232 = vmatpush.msra.mxu0 0.0
    %1233 = vmatpush.msra.mxu0 0.0
    %1234 = vmatpush.msra.mxu0 0.0
    %1235 = vmatpush.msra.mxu0 0.0
    %1236 = vmatpush.msra.mxu0 0.0
    %1237 = vmatpush.msra.mxu0 0.0
    %1238 = vmatpush.msra.mxu0 0.0
    %1239 = vmatpush.msra.mxu0 0.0
    %1240 = vmatpush.msra.mxu0 %v41
    %1241 = vmatpush.msra.mxu0 %v40
    %1242 = vmatpush.msra.mxu0 %v39
    %1243 = vmatpush.msra.mxu0 %v38
    %1244 = vmatmul.f32.gmra.mxu0 %v1223
    %v1245 = vpop.f32.mrf.mxu0
    %v1246 = vadd.f32 %v607, %v1245
    %1247 = vmatmul.f32.gmra.mxu0 %v1226
    %v1248 = vpop.f32.mrf.mxu0
    %v1249 = vadd.f32 %v607, %v1248
    %1250 = vdwg.mxu0
    %v1252 = vsel %vm53, %v1246, 0
    %v1255 = vsel %vm53, %v1249, 0
    %1257 = vmatpush.msra.mxu0 0.0
    %1258 = vmatpush.msra.mxu0 0.0
    %1259 = vmatpush.msra.mxu0 0.0
    %1260 = vmatpush.msra.mxu0 0.0
    %1261 = vmatpush.msra.mxu0 0.0
    %1262 = vmatpush.msra.mxu0 0.0
    %1263 = vmatpush.msra.mxu0 0.0
    %1264 = vmatpush.msra.mxu0 0.0
    %1265 = vmatpush.msra.mxu0 0.0
    %1266 = vmatpush.msra.mxu0 0.0
    %1267 = vmatpush.msra.mxu0 0.0
    %1268 = vmatpush.msra.mxu0 0.0
    %1269 = vmatpush.msra.mxu0 %v46
    %1270 = vmatpush.msra.mxu0 %v45
    %1271 = vmatpush.msra.mxu0 %v44
    %1272 = vmatpush.msra.mxu0 %v43
    %1273 = vmatmul.f32.gmra.mxu0 %v1252
    %v1274 = vpop.f32.mrf.mxu0
    %v1275 = vadd.f32 %v639, %v1274
    %1276 = vmatmul.f32.gmra.mxu0 %v1255
    %v1277 = vpop.f32.mrf.mxu0
    %v1278 = vadd.f32 %v639, %v1277
    %1279 = vdwg.mxu0
    %v1280 = vsel %vm53, %v665, 0.0
    %v1281 = vsel %vm53, %v668, 0.0
    %v1282 = vadd.f32 %v1280, %v1281
    %v1283 = vsel %vm53, %v1275, 0.0
    %v1284 = vadd.f32 %v1282, %v1283
    %v1285 = vsel %vm53, %v1278, 0.0
    %v1286 = vadd.f32 %v1284, %v1285
    %v1287 = vrot.slane %v1286, 4
    %v1288 = vadd.f32 %v1286, %v1287
    %v1289 = vrot.slane %v1288, 2
    %v1290 = vadd.f32 %v1288, %v1289
    %v1291 = vrot.slane %v1290, 1
    %v1292 = vadd.f32 %v1290, %v1291
    %v1293 = vrcp.pop 32.0
    %v1294 = vmul.f32 32.0, %v1293
    %v1295 = vsub.f32 1.0, %v1294
    %v1296 = vmul.f32 %v1293, %v1295
    %v1297 = vadd.f32 %v1293, %v1296
    %vm1298 = vweird.f32 %v1293
    %v1299 = vsel %vm1298, %v1293, %v1297
    %v1300 = vmul.f32 %v1292, %v1299
    %v1301 = vsub.f32 %v665, %v1300
    %v1302 = vsub.f32 %v668, %v1300
    %v1303 = vsub.f32 %v1275, %v1300
    %v1304 = vsub.f32 %v1278, %v1300
    %v1305 = vmul.f32 %v1301, %v1301
    %v1306 = vmul.f32 %v1302, %v1302
    %v1307 = vmul.f32 %v1303, %v1303
    %v1308 = vmul.f32 %v1304, %v1304
    %v1309 = vsel %vm53, %v1305, 0.0
    %v1310 = vsel %vm53, %v1306, 0.0
    %v1311 = vadd.f32 %v1309, %v1310
    %v1312 = vsel %vm53, %v1307, 0.0
    %v1313 = vadd.f32 %v1311, %v1312
    %v1314 = vsel %vm53, %v1308, 0.0
    %v1315 = vadd.f32 %v1313, %v1314
    %v1316 = vrot.slane %v1315, 4
    %v1317 = vadd.f32 %v1315, %v1316
    %v1318 = vrot.slane %v1317, 2
    %v1319 = vadd.f32 %v1317, %v1318
    %v1320 = vrot.slane %v1319, 1
    %v1321 = vadd.f32 %v1319, %v1320
    %v1322 = vmul.f32 %v1321, %v1299
    %v1323 = vadd.f32 %v1322, 1e-05
    %v1324 = vrsqrt.pop %v1323
    %v1325 = vmul.f32 %v1324, %v1323
    %v1326 = vmul.f32 %v1325, %v1324
    %v1327 = vmul.f32 0.5, %v1326
    %v1328 = vsub.f32 1.5, %v1327
    %v1329 = vmul.f32 %v1324, %v1328
    %vm1330 = vweird.f32 %v1323
    %vm1331 = vweird.f32 %v1324
    %vm1332 = vmor %vm1330, %vm1331
    %v1333 = vsel %vm1332, %v1324, %v1329
    %v1334 = vmul.f32 %v1301, %v1333
    %v1335 = vmul.f32 %v1302, %v1333
    %v1336 = vmul.f32 %v1303, %v1333
    %v1337 = vmul.f32 %v1304, %v1333
    %v1338 = vld [vmem:[%s7] sm:$0x1]
    %v1340 = vperm.slane %v1338, 0
    %v1342 = vmul.f32 %v1334, %v1340
    %v1343 = vmul.f32 %v1335, %v1340
    %v1344 = vmul.f32 %v1336, %v1340
    %v1345 = vmul.f32 %v1337, %v1340
    %v1346 = vld [vmem:[%s8] sm:$0x1]
    %v1348 = vperm.slane %v1346, 0
    %v1350 = vadd.f32 %v1342, %v1348
    %v1351 = vadd.f32 %v1343, %v1348
    %v1352 = vadd.f32 %v1344, %v1348
    %v1353 = vadd.f32 %v1345, %v1348
    %v1354 = vadd.f32 %v1350, %v48
    %v1355 = vadd.f32 %v1351, %v49
    %v1356 = vadd.f32 %v1352, %v671
    %v1357 = vadd.f32 %v1353, %v672
    %1358 = vst.msk [vmem:[#allocation2] sm:$0xff] %vm53, %v1354
    %1359 = vst.msk [vmem:[#allocation2 + $0x8] sm:$0xff] %vm53, %v1355
    %s1360 = scalar_lea.vmem [#allocation2], 16
    %1361 = vst.msk [vmem:[%s1360] sm:$0xff] %vm53, %v1356
    %1362 = vst.msk [vmem:[%s1360 + $0x8] sm:$0xff] %vm53, %v1357
    // Predicated region
    $region38: #{interpolate_forward.1} parent=1 // pred_check
      _
    $region39: #{interpolate_forward.1} parent=1 // pred_check_branch
      %1364 = sbr.rel (0) target = $region41
    $region40: #{interpolate_forward.1} parent=1 // pred_region
      %1366 = vsyncadd [#allocation3], 0
      %s1367 = sshll.u32 [#allocation2], 4
      %s1368 = int_to_ptr.vmem [resolvable:$true] %s1367
      %s1369 = sshll.u32 %s9, 4
      %s1370 = int_to_ptr.hbm [resolvable:$true] %s1369
      %1375 = dma.vmem_to_hbm [thread:$0]  %s1368, 512, %s1370, [#allocation3], 128, 128, 8
    $region41: #{interpolate_forward.1} parent=1 // pred_fallthru
      _
    // Predicated region
    $region42: #{interpolate_forward.1} parent=1 // pred_check
      _
    $region43: #{interpolate_forward.1} parent=1 // pred_check_branch
      %1377 = sbr.rel (0) target = $region45
    $region44: #{interpolate_forward.1} parent=1 // pred_region
      %1379 = dma.done [#allocation3], 512
    $region45: #{interpolate_forward.1} parent=1 // pred_fallthru
      _
    %1380 = vsyncpa [#allocation3], 1

</llo_original>
